<compile_context>
chip_gen: v6e
topology: v6e:2x2x1
jax: 0.10.0
libtpu: 0.0.40
codegen_flags: <defaults>
</compile_context>

<pallas_src>
import numpy as np
import jax
import jax.numpy as jnp
from jax.experimental import pallas as pl
from jax.experimental.pallas import tpu as pltpu


def _interp_matrix_np(in_size: int, out_size: int) -> np.ndarray:
    """1-D linear interpolation matrix W (out_size, in_size), align_corners=True,
    such that out = W @ in."""
    if out_size == 1:
        src = np.zeros((1,), dtype=np.float64)
    else:
        src = np.arange(out_size, dtype=np.float64) * ((in_size - 1) / (out_size - 1))
    lo = np.clip(np.floor(src).astype(np.int64), 0, in_size - 1)
    hi = np.minimum(lo + 1, in_size - 1)
    frac = (src - lo).astype(np.float32)
    w = np.zeros((out_size, in_size), dtype=np.float32)
    rows = np.arange(out_size)
    np.add.at(w, (rows, lo), (1.0 - frac).astype(np.float32))
    np.add.at(w, (rows, hi), frac)
    return w


def _vmem_capacity_bytes() -> int:
    try:
        return int(pltpu.get_tpu_info().vmem_capacity_bytes)
    except Exception:
        return 64 << 20  # conservative default (v7x per-TC VMEM)


def _block_footprint_bytes(bc, h_in, w_in, h_out, w_out, itemsize) -> int:
    """Approximate VMEM footprint of one grid step."""
    io = 2 * bc * (h_in * w_in + h_out * w_out) * itemsize      # double-buffered x/out blocks
    wts = 2 * (h_out * h_in + w_in * w_out) * itemsize          # (small) weight blocks
    f32 = 4 * bc * (h_out * h_in + w_in * w_out                 # broadcast weights
                    + h_out * w_in + h_out * w_out)             # intermediates / f32 result
    return io + wts + f32


def _choose_block_channels(nc, h_in, w_in, h_out, w_out, itemsize, budget) -> int:
    """How many (n, c) planes to fold into one grid step."""
    divisors = [d for d in range(1, nc + 1) if nc % d == 0]
    fits = [d for d in divisors
            if _block_footprint_bytes(d, h_in, w_in, h_out, w_out, itemsize) <= budget]
    if not fits:
        return 1
    total_io = nc * (h_in * w_in + h_out * w_out) * itemsize
    if total_io <= (2 << 20):
        # Tiny, overhead-bound problem: single grid step over all planes.
        return max(fits)
    # Larger problems: keep >= 2 grid steps so the pipeline overlaps HBM
    # traffic with compute (and both v7x TensorCores can get work).
    multi = [d for d in fits if nc // d >= 2]
    return max(multi) if multi else max(fits)


def _interp_kernel(wh_ref, ww_ref, x_ref, o_ref):
    # wh_ref: (H_out, H_in)   row-interp matrix (grid-invariant)
    # ww_ref: (W_in, W_out)   column-interp matrix transposed (grid-invariant)
    # x_ref : (bc, H_in, W_in)   bc channel planes (copy-free view of NCHW)
    # o_ref : (bc, H_out, W_out)
    bc, h_in, w_in = x_ref.shape
    h_out = wh_ref.shape[0]
    w_out = ww_ref.shape[1]

    x = x_ref[...]
    # Row pass: (bc, H_out, H_in) x (bc, H_in, W_in) -> (bc, H_out, W_in)
    whb = jnp.broadcast_to(wh_ref[...], (bc, h_out, h_in))
    tmp = jax.lax.dot_general(
        whb, x, (((2,), (1,)), ((0,), (0,))), preferred_element_type=jnp.float32)
    # Column pass: (bc, H_out, W_in) x (bc, W_in, W_out) -> (bc, H_out, W_out)
    wwb = jnp.broadcast_to(ww_ref[...], (bc, w_in, w_out))
    out = jax.lax.dot_general(
        tmp.astype(ww_ref.dtype), wwb, (((2,), (1,)), ((0,), (0,))),
        preferred_element_type=jnp.float32)
    o_ref[...] = out.astype(o_ref.dtype)


def interpolate_bilinear(x: jnp.ndarray, stride: int) -> jnp.ndarray:
    """Equivalent of torch.nn.functional.interpolate(x, scale_factor=stride,
    mode='bilinear', align_corners=True) for NCHW input."""
    n, c, h_in, w_in = x.shape
    h_out, w_out = int(h_in * stride), int(w_in * stride)
    nc = n * c

    orig_dtype = x.dtype
    if x.dtype == jnp.bfloat16:
        w_dtype = jnp.bfloat16
    else:
        w_dtype = jnp.float32
        if x.dtype != jnp.float32:
            x = x.astype(jnp.float32)
    itemsize = jnp.dtype(x.dtype).itemsize

    cap = _vmem_capacity_bytes()
    budget = int(0.6 * cap)
    bc = _choose_block_channels(nc, h_in, w_in, h_out, w_out, itemsize, budget)
    g = nc // bc
    footprint = _block_footprint_bytes(bc, h_in, w_in, h_out, w_out, itemsize)
    vmem_limit = int(min(max(footprint * 5 // 4, 8 << 20), int(0.9 * cap)))

    # Host-side (numpy) interpolation weights, in the compute dtype.
    wh = jnp.asarray(_interp_matrix_np(h_in, h_out), dtype=w_dtype)        # (H_out, H_in)
    wwt = jnp.asarray(_interp_matrix_np(w_in, w_out).T, dtype=w_dtype)     # (W_in, W_out)

    # Copy-free views only (no transposes -> no extra HBM round-trips).
    x3 = x.reshape(nc, h_in, w_in)

    out3 = pl.pallas_call(
        _interp_kernel,
        out_shape=jax.ShapeDtypeStruct((nc, h_out, w_out), x.dtype),
        grid_spec=pltpu.PrefetchScalarGridSpec(
            num_scalar_prefetch=0,
            grid=(g,),
            in_specs=[
                pl.BlockSpec((h_out, h_in), lambda i: (0, 0)),
                pl.BlockSpec((w_in, w_out), lambda i: (0, 0)),
                pl.BlockSpec((bc, h_in, w_in), lambda i: (i, 0, 0)),
            ],
            out_specs=pl.BlockSpec((bc, h_out, w_out), lambda i: (i, 0, 0)),
        ),
        compiler_params=pltpu.CompilerParams(
            dimension_semantics=(("parallel",) if g > 1 else ("arbitrary",)),
            vmem_limit_bytes=vmem_limit,
        ),
    )(wh, wwt, x3)

    out = out3.reshape(n, c, h_out, w_out)   # free view back to NCHW
    if out.dtype != orig_dtype:
        out = out.astype(orig_dtype)
    return out


def _reference(x: jnp.ndarray, stride: int) -> jnp.ndarray:
    """Pure-JAX reference (same separable formulation) for correctness check."""
    n, c, h_in, w_in = x.shape
    wh = jnp.asarray(_interp_matrix_np(h_in, int(h_in * stride)))
    ww = jnp.asarray(_interp_matrix_np(w_in, int(w_in * stride)))
    return jnp.einsum(
        "oh,nchw,pw->ncop", wh, x.astype(jnp.float32), ww
    ).astype(x.dtype)


if __name__ == "__main__":
    key = jax.random.PRNGKey(0)
    stride = 2
    x = jax.random.normal(key, (2, 4, 16, 16), dtype=jnp.float32)

    out = interpolate_bilinear(x, stride)
    out = jax.block_until_ready(out)

    ref = _reference(x, stride)
    assert out.shape == (2, 4, 32, 32), out.shape
    assert jnp.allclose(out, ref, atol=1e-5, rtol=1e-5), float(
        jnp.max(jnp.abs(out - ref))
    )
    print("KERNEL_OK")
</pallas_src>

<mosaic_0001>
module attributes {stable_mosaic.version = 11 : i64} {
  func.func @_interp_kernel(%arg0: i32, %arg1: memref<32x16xf32, #tpu.memory_space<vmem>>, %arg2: memref<16x32xf32, #tpu.memory_space<vmem>>, %arg3: memref<8x16x16xf32, #tpu.memory_space<vmem>>, %arg4: memref<8x32x32xf32, #tpu.memory_space<vmem>>) attributes {dimension_semantics = [#tpu.dimension_semantics<arbitrary>], iteration_bounds = array<i64: 1>, scalar_prefetch = 0 : i64, scratch_operands = 0 : i64, tpu.core_type = #tpu.core_type<tc>, window_params = [{pipeline_mode = #tpu.pipeline_mode<synchronous>, transform_indices = @transform_0, window_bounds = array<i64: 32, 16>}, {pipeline_mode = #tpu.pipeline_mode<synchronous>, transform_indices = @transform_1, window_bounds = array<i64: 16, 32>}, {transform_indices = @transform_2, window_bounds = array<i64: 8, 16, 16>}, {transform_indices = @transform_3, window_bounds = array<i64: 8, 32, 32>}]} {
    %c0 = arith.constant 0 : index
    %c0_0 = arith.constant 0 : index
    %c0_1 = arith.constant 0 : index
    %0 = vector.load %arg3[%c0, %c0_0, %c0_1] : memref<8x16x16xf32, #tpu.memory_space<vmem>>, vector<8x16x16xf32>
    %c0_2 = arith.constant 0 : index
    %c0_3 = arith.constant 0 : index
    %1 = vector.load %arg1[%c0_2, %c0_3] : memref<32x16xf32, #tpu.memory_space<vmem>>, vector<32x16xf32>
    %2 = vector.shape_cast %1 : vector<32x16xf32> to vector<1x32x16xf32>
    %3 = vector.broadcast %2 : vector<1x32x16xf32> to vector<8x32x16xf32>
    %cst = arith.constant dense<0.000000e+00> : vector<8x32x16xf32>
    %4 = tpu.matmul %3, %0, %cst {dimension_numbers = #tpu.dot_dimension_numbers<[2], [1], [1], [2], [0, 0, 0, 1, 1, 2], [0], [0]>} : vector<8x32x16xf32>, vector<8x16x16xf32>, vector<8x32x16xf32> -> vector<8x32x16xf32>
    %c0_4 = arith.constant 0 : index
    %c0_5 = arith.constant 0 : index
    %5 = vector.load %arg2[%c0_4, %c0_5] : memref<16x32xf32, #tpu.memory_space<vmem>>, vector<16x32xf32>
    %6 = vector.shape_cast %5 : vector<16x32xf32> to vector<1x16x32xf32>
    %7 = vector.broadcast %6 : vector<1x16x32xf32> to vector<8x16x32xf32>
    %cst_6 = arith.constant dense<0.000000e+00> : vector<8x32x32xf32>
    %8 = tpu.matmul %4, %7, %cst_6 {dimension_numbers = #tpu.dot_dimension_numbers<[2], [1], [1], [2], [0, 0, 0, 1, 1, 2], [0], [0]>} : vector<8x32x16xf32>, vector<8x16x32xf32>, vector<8x32x32xf32> -> vector<8x32x32xf32>
    %c0_7 = arith.constant 0 : index
    %c0_8 = arith.constant 0 : index
    %c0_9 = arith.constant 0 : index
    %9 = vector.load %arg4[%c0_7, %c0_8, %c0_9] : memref<8x32x32xf32, #tpu.memory_space<vmem>>, vector<8x32x32xf32>
    tpu.vector_store %arg4[%c0_7, %c0_8, %c0_9], %8 {strides = array<i32>} : memref<8x32x32xf32, #tpu.memory_space<vmem>>, vector<8x32x32xf32>,
    return
  }
  func.func @transform_0(%arg0: i32) -> (i32, i32) {
    %c0_i32 = arith.constant 0 : i32
    %c0_i32_0 = arith.constant 0 : i32
    %c0_i32_1 = arith.constant 0 : i32
    return %c0_i32, %c0_i32_0 : i32, i32
  }
  func.func @transform_1(%arg0: i32) -> (i32, i32) {
    %c0_i32 = arith.constant 0 : i32
    %c0_i32_0 = arith.constant 0 : i32
    %c0_i32_1 = arith.constant 0 : i32
    return %c0_i32, %c0_i32_0 : i32, i32
  }
  func.func @transform_2(%arg0: i32) -> (i32, i32, i32) {
    %c0_i32 = arith.constant 0 : i32
    %c0_i32_0 = arith.constant 0 : i32
    %c0_i32_1 = arith.constant 0 : i32
    return %arg0, %c0_i32, %c0_i32_0 : i32, i32, i32
  }
  func.func @transform_3(%arg0: i32) -> (i32, i32, i32) {
    %c0_i32 = arith.constant 0 : i32
    %c0_i32_0 = arith.constant 0 : i32
    %c0_i32_1 = arith.constant 0 : i32
    return %arg0, %c0_i32, %c0_i32_0 : i32, i32, i32
  }
}

</mosaic_0001>

<llo_original>
// kernel: tpu_custom_call.1
$region0: #{tpu_custom_call.1}
  #allocation0 [shape = 'u32[]', space=smem, size = 0x4, offset = 0x4, fixed_abs, tag = 'smem constant byte address 0x4 - core index']
  #allocation1 [shape = 'u32[144,128]{1,0:T(1,128)}', space=vmem, size = 0x12000, scoped, tag = 'internal scratch']
  %s0 = inlined_call_operand.vmem [shape: f32[32,16], index: 0, kind: input, shape index: {}]
  %s1 = inlined_call_operand.vmem [shape: f32[16,32], index: 1, kind: input, shape index: {}]
  %s2 = inlined_call_operand.hbm [shape: f32[8,16,16], index: 2, kind: input, shape index: {}]
  %s3 = inlined_call_operand.hbm [shape: f32[8,32,32], index: 3, kind: output, shape index: {}]
  %s4 = sld [smem:[#allocation0]]
  $region26: #{tpu_custom_call.1} parent=0
    _
  %s6 = ssub.s32 1, %s4
  %s7 = scalar_select 0, %s6, %s4
  $region1: #{tpu_custom_call.1} parent=0
    #allocation2 [shape = 'u8[65536]{0}', space=vmem, size = 0x10000, scoped, tag = 'input window, operand 2, single buffered']
    #allocation3 [shape = 's32[1]{0}', space=sflag, size = 0x4, scoped, tag = 'scoped memory for tpu_custom_call.1']
    #allocation4 [shape = 's32[1]{0}', space=sflag, size = 0x4, scoped, tag = 'scoped memory for tpu_custom_call.1']
    #allocation5 [shape = 'u8[131072]{0}', space=vmem, size = 0x20000, scoped, tag = 'output window, operand 0, single buffered']
    %8 = vsyncpa [#allocation3], 0
    %9 = vsyncpa [#allocation4], 0
    // Predicated region
    $region2: #{tpu_custom_call.1} parent=1 // pred_check
      _
    $region3: #{tpu_custom_call.1} parent=1 // pred_check_branch
      %11 = sbr.rel (0) target = $region5
    $region4: #{tpu_custom_call.1} parent=1 // pred_region
      _
    $region5: #{tpu_custom_call.1} parent=1 // pred_fallthru
      _
    // Predicated region
    $region6: #{tpu_custom_call.1} parent=1 // pred_check
      _
    $region7: #{tpu_custom_call.1} parent=1 // pred_check_branch
      %13 = sbr.rel (0) target = $region9
    $region8: #{tpu_custom_call.1} parent=1 // pred_region
      _
    $region9: #{tpu_custom_call.1} parent=1 // pred_fallthru
      _
    // Predicated region
    $region10: #{tpu_custom_call.1} parent=1 // pred_check
      _
    $region11: #{tpu_custom_call.1} parent=1 // pred_check_branch
      %15 = sbr.rel (0) target = $region13
    $region12: #{tpu_custom_call.1} parent=1 // pred_region
      %s17 = ssub.s32 2048, 2048
      %18 = vsyncadd [#allocation3], %s17
      %s19 = sshll.u32 [#allocation2], 4
      %s20 = int_to_ptr.vmem [resolvable:$true] %s19
      %25 = dma.hbm_to_vmem [thread:$0]  %s2, 2048, %s20, [#allocation3], 128, 128, 8
    $region13: #{tpu_custom_call.1} parent=1 // pred_fallthru
      _
    // Predicated region
    $region14: #{tpu_custom_call.1} parent=1 // pred_check
      _
    $region15: #{tpu_custom_call.1} parent=1 // pred_check_branch
      %27 = sbr.rel (0) target = $region17
    $region16: #{tpu_custom_call.1} parent=1 // pred_region
      %28 = dma.done [#allocation3], 2048
    $region17: #{tpu_custom_call.1} parent=1 // pred_fallthru
      _
    %v29 = vld [vmem:[#allocation2] sm:$0xff]
    %v30 = vld [vmem:[#allocation2 + $0x8] sm:$0xff]
    %v31 = vld [vmem:[#allocation2 + $0x10] sm:$0xff]
    %v32 = vld [vmem:[#allocation2 + $0x18] sm:$0xff]
    %v33 = vld [vmem:[#allocation2 + $0x20] sm:$0xff]
    %v34 = vld [vmem:[#allocation2 + $0x28] sm:$0xff]
    %v35 = vld [vmem:[#allocation2 + $0x30] sm:$0xff]
    %v36 = vld [vmem:[#allocation2 + $0x38] sm:$0xff]
    %v37 = vld [vmem:[#allocation2 + $0x40] sm:$0xff]
    %v38 = vld [vmem:[#allocation2 + $0x48] sm:$0xff]
    %v39 = vld [vmem:[#allocation2 + $0x50] sm:$0xff]
    %v40 = vld [vmem:[#allocation2 + $0x58] sm:$0xff]
    %v41 = vld [vmem:[#allocation2 + $0x60] sm:$0xff]
    %v42 = vld [vmem:[#allocation2 + $0x68] sm:$0xff]
    %v43 = vld [vmem:[#allocation2 + $0x70] sm:$0xff]
    %v44 = vld [vmem:[#allocation2 + $0x78] sm:$0xff]
    %v45 = vld [vmem:[%s0] sm:$0xff]
    %v46 = vld [vmem:[%s0 + $0x8] sm:$0xff]
    %v47 = vld [vmem:[%s0 + $0x10] sm:$0xff]
    %v48 = vld [vmem:[%s0 + $0x18] sm:$0xff]
    %vm49 = vcmask 130048
    %v51 = vsel %vm49, %v45, 0
    %v54 = vsel %vm49, %v46, 0
    %v57 = vsel %vm49, %v47, 0
    %v60 = vsel %vm49, %v48, 0
    %62 = vmatprep.subr.mxu0 0.0
    %63 = vmatpush1.msra.mxu0 0.0
    %64 = vmatprep.subr.mxu0 0.0
    %65 = vmatpush1.msra.mxu0 0.0
    %66 = vmatprep.subr.mxu0 0.0
    %67 = vmatpush1.msra.mxu0 0.0
    %68 = vmatprep.subr.mxu0 0.0
    %69 = vmatpush1.msra.mxu0 0.0
    %70 = vmatprep.subr.mxu0 0.0
    %71 = vmatpush1.msra.mxu0 0.0
    %72 = vmatprep.subr.mxu0 0.0
    %73 = vmatpush1.msra.mxu0 0.0
    %74 = vmatprep.subr.mxu0 0.0
    %75 = vmatpush1.msra.mxu0 0.0
    %76 = vmatprep.subr.mxu0 0.0
    %77 = vmatpush1.msra.mxu0 0.0
    %78 = vmatprep.subr.mxu0 0.0
    %79 = vmatpush1.msra.mxu0 0.0
    %80 = vmatprep.subr.mxu0 0.0
    %81 = vmatpush1.msra.mxu0 0.0
    %82 = vmatprep.subr.mxu0 0.0
    %83 = vmatpush1.msra.mxu0 0.0
    %84 = vmatprep.subr.mxu0 0.0
    %85 = vmatpush1.msra.mxu0 0.0
    %86 = vmatprep.subr.mxu0 0.0
    %87 = vmatpush1.msra.mxu0 0.0
    %88 = vmatprep.subr.mxu0 0.0
    %89 = vmatpush1.msra.mxu0 0.0
    %90 = vmatprep.subr.mxu0 0.0
    %91 = vmatpush1.msra.mxu0 %v30
    %92 = vmatprep.subr.mxu0 0.0
    %93 = vmatpush1.msra.mxu0 %v29
    %94 = vmatprep.subr.mxu0 0.0
    %95 = vmatpush2.msra.mxu0 0.0
    %96 = vmatprep.subr.mxu0 0.0
    %97 = vmatpush2.msra.mxu0 0.0
    %98 = vmatprep.subr.mxu0 0.0
    %99 = vmatpush2.msra.mxu0 0.0
    %100 = vmatprep.subr.mxu0 0.0
    %101 = vmatpush2.msra.mxu0 0.0
    %102 = vmatprep.subr.mxu0 0.0
    %103 = vmatpush2.msra.mxu0 0.0
    %104 = vmatprep.subr.mxu0 0.0
    %105 = vmatpush2.msra.mxu0 0.0
    %106 = vmatprep.subr.mxu0 0.0
    %107 = vmatpush2.msra.mxu0 0.0
    %108 = vmatprep.subr.mxu0 0.0
    %109 = vmatpush2.msra.mxu0 0.0
    %110 = vmatprep.subr.mxu0 0.0
    %111 = vmatpush2.msra.mxu0 0.0
    %112 = vmatprep.subr.mxu0 0.0
    %113 = vmatpush2.msra.mxu0 0.0
    %114 = vmatprep.subr.mxu0 0.0
    %115 = vmatpush2.msra.mxu0 0.0
    %116 = vmatprep.subr.mxu0 0.0
    %117 = vmatpush2.msra.mxu0 0.0
    %118 = vmatprep.subr.mxu0 0.0
    %119 = vmatpush2.msra.mxu0 0.0
    %120 = vmatprep.subr.mxu0 0.0
    %121 = vmatpush2.msra.mxu0 0.0
    %122 = vmatprep.subr.mxu0 0.0
    %123 = vmatpush2.msra.mxu0 0.0
    %124 = vmatprep.subr.mxu0 0.0
    %125 = vmatpush2.msra.mxu0 0.0
    %126 = vmatprep.mubr.f32.mxu0 0.0
    %127 = vmatmul.mubr.f32.gmra.mxu0 %v51
    %v128 = vpop.f32.mrf.mxu0
    %v129 = vadd.f32 0.0, %v128
    %v130 = vpop.f32.mrf.mxu0
    %131 = vmatprep.mubr.f32.mxu0 0.0
    %132 = vmatmul.mubr.f32.gmra.mxu0 %v54
    %v133 = vpop.f32.mrf.mxu0
    %v134 = vadd.f32 0.0, %v133
    %v135 = vpop.f32.mrf.mxu0
    %136 = vmatprep.mubr.f32.mxu0 0.0
    %137 = vmatmul.mubr.f32.gmra.mxu0 %v57
    %v138 = vpop.f32.mrf.mxu0
    %v139 = vadd.f32 0.0, %v138
    %v140 = vpop.f32.mrf.mxu0
    %141 = vmatprep.mubr.f32.mxu0 0.0
    %142 = vmatmul.mubr.f32.gmra.mxu0 %v60
    %v143 = vpop.f32.mrf.mxu0
    %v144 = vadd.f32 0.0, %v143
    %v145 = vpop.f32.mrf.mxu0
    %146 = vdwg.mxu0
    %147 = vmatprep.subr.mxu0 0.0
    %148 = vmatpush1.msra.mxu0 0.0
    %149 = vmatprep.subr.mxu0 0.0
    %150 = vmatpush1.msra.mxu0 0.0
    %151 = vmatprep.subr.mxu0 0.0
    %152 = vmatpush1.msra.mxu0 0.0
    %153 = vmatprep.subr.mxu0 0.0
    %154 = vmatpush1.msra.mxu0 0.0
    %155 = vmatprep.subr.mxu0 0.0
    %156 = vmatpush1.msra.mxu0 0.0
    %157 = vmatprep.subr.mxu0 0.0
    %158 = vmatpush1.msra.mxu0 0.0
    %159 = vmatprep.subr.mxu0 0.0
    %160 = vmatpush1.msra.mxu0 0.0
    %161 = vmatprep.subr.mxu0 0.0
    %162 = vmatpush1.msra.mxu0 0.0
    %163 = vmatprep.subr.mxu0 0.0
    %164 = vmatpush1.msra.mxu0 0.0
    %165 = vmatprep.subr.mxu0 0.0
    %166 = vmatpush1.msra.mxu0 0.0
    %167 = vmatprep.subr.mxu0 0.0
    %168 = vmatpush1.msra.mxu0 0.0
    %169 = vmatprep.subr.mxu0 0.0
    %170 = vmatpush1.msra.mxu0 0.0
    %171 = vmatprep.subr.mxu0 0.0
    %172 = vmatpush1.msra.mxu0 0.0
    %173 = vmatprep.subr.mxu0 0.0
    %174 = vmatpush1.msra.mxu0 0.0
    %175 = vmatprep.subr.mxu0 0.0
    %176 = vmatpush1.msra.mxu0 %v32
    %177 = vmatprep.subr.mxu0 0.0
    %178 = vmatpush1.msra.mxu0 %v31
    %179 = vmatprep.subr.mxu0 0.0
    %180 = vmatpush2.msra.mxu0 0.0
    %181 = vmatprep.subr.mxu0 0.0
    %182 = vmatpush2.msra.mxu0 0.0
    %183 = vmatprep.subr.mxu0 0.0
    %184 = vmatpush2.msra.mxu0 0.0
    %185 = vmatprep.subr.mxu0 0.0
    %186 = vmatpush2.msra.mxu0 0.0
    %187 = vmatprep.subr.mxu0 0.0
    %188 = vmatpush2.msra.mxu0 0.0
    %189 = vmatprep.subr.mxu0 0.0
    %190 = vmatpush2.msra.mxu0 0.0
    %191 = vmatprep.subr.mxu0 0.0
    %192 = vmatpush2.msra.mxu0 0.0
    %193 = vmatprep.subr.mxu0 0.0
    %194 = vmatpush2.msra.mxu0 0.0
    %195 = vmatprep.subr.mxu0 0.0
    %196 = vmatpush2.msra.mxu0 0.0
    %197 = vmatprep.subr.mxu0 0.0
    %198 = vmatpush2.msra.mxu0 0.0
    %199 = vmatprep.subr.mxu0 0.0
    %200 = vmatpush2.msra.mxu0 0.0
    %201 = vmatprep.subr.mxu0 0.0
    %202 = vmatpush2.msra.mxu0 0.0
    %203 = vmatprep.subr.mxu0 0.0
    %204 = vmatpush2.msra.mxu0 0.0
    %205 = vmatprep.subr.mxu0 0.0
    %206 = vmatpush2.msra.mxu0 0.0
    %207 = vmatprep.subr.mxu0 0.0
    %208 = vmatpush2.msra.mxu0 0.0
    %209 = vmatprep.subr.mxu0 0.0
    %210 = vmatpush2.msra.mxu0 0.0
    %211 = vmatprep.mubr.f32.mxu0 0.0
    %212 = vmatmul.mubr.f32.gmra.mxu0 %v51
    %v213 = vpop.f32.mrf.mxu0
    %v214 = vadd.f32 0.0, %v213
    %v215 = vpop.f32.mrf.mxu0
    %216 = vmatprep.mubr.f32.mxu0 0.0
    %217 = vmatmul.mubr.f32.gmra.mxu0 %v54
    %v218 = vpop.f32.mrf.mxu0
    %v219 = vadd.f32 0.0, %v218
    %v220 = vpop.f32.mrf.mxu0
    %221 = vmatprep.mubr.f32.mxu0 0.0
    %222 = vmatmul.mubr.f32.gmra.mxu0 %v57
    %v223 = vpop.f32.mrf.mxu0
    %v224 = vadd.f32 0.0, %v223
    %v225 = vpop.f32.mrf.mxu0
    %226 = vmatprep.mubr.f32.mxu0 0.0
    %227 = vmatmul.mubr.f32.gmra.mxu0 %v60
    %v228 = vpop.f32.mrf.mxu0
    %v229 = vadd.f32 0.0, %v228
    %v230 = vpop.f32.mrf.mxu0
    %231 = vdwg.mxu0
    %232 = vmatprep.subr.mxu0 0.0
    %233 = vmatpush1.msra.mxu0 0.0
    %234 = vmatprep.subr.mxu0 0.0
    %235 = vmatpush1.msra.mxu0 0.0
    %236 = vmatprep.subr.mxu0 0.0
    %237 = vmatpush1.msra.mxu0 0.0
    %238 = vmatprep.subr.mxu0 0.0
    %239 = vmatpush1.msra.mxu0 0.0
    %240 = vmatprep.subr.mxu0 0.0
    %241 = vmatpush1.msra.mxu0 0.0
    %242 = vmatprep.subr.mxu0 0.0
    %243 = vmatpush1.msra.mxu0 0.0
    %244 = vmatprep.subr.mxu0 0.0
    %245 = vmatpush1.msra.mxu0 0.0
    %246 = vmatprep.subr.mxu0 0.0
    %247 = vmatpush1.msra.mxu0 0.0
    %248 = vmatprep.subr.mxu0 0.0
    %249 = vmatpush1.msra.mxu0 0.0
    %250 = vmatprep.subr.mxu0 0.0
    %251 = vmatpush1.msra.mxu0 0.0
    %252 = vmatprep.subr.mxu0 0.0
    %253 = vmatpush1.msra.mxu0 0.0
    %254 = vmatprep.subr.mxu0 0.0
    %255 = vmatpush1.msra.mxu0 0.0
    %256 = vmatprep.subr.mxu0 0.0
    %257 = vmatpush1.msra.mxu0 0.0
    %258 = vmatprep.subr.mxu0 0.0
    %259 = vmatpush1.msra.mxu0 0.0
    %260 = vmatprep.subr.mxu0 0.0
    %261 = vmatpush1.msra.mxu0 %v34
    %262 = vmatprep.subr.mxu0 0.0
    %263 = vmatpush1.msra.mxu0 %v33
    %264 = vmatprep.subr.mxu0 0.0
    %265 = vmatpush2.msra.mxu0 0.0
    %266 = vmatprep.subr.mxu0 0.0
    %267 = vmatpush2.msra.mxu0 0.0
    %268 = vmatprep.subr.mxu0 0.0
    %269 = vmatpush2.msra.mxu0 0.0
    %270 = vmatprep.subr.mxu0 0.0
    %271 = vmatpush2.msra.mxu0 0.0
    %272 = vmatprep.subr.mxu0 0.0
    %273 = vmatpush2.msra.mxu0 0.0
    %274 = vmatprep.subr.mxu0 0.0
    %275 = vmatpush2.msra.mxu0 0.0
    %276 = vmatprep.subr.mxu0 0.0
    %277 = vmatpush2.msra.mxu0 0.0
    %278 = vmatprep.subr.mxu0 0.0
    %279 = vmatpush2.msra.mxu0 0.0
    %280 = vmatprep.subr.mxu0 0.0
    %281 = vmatpush2.msra.mxu0 0.0
    %282 = vmatprep.subr.mxu0 0.0
    %283 = vmatpush2.msra.mxu0 0.0
    %284 = vmatprep.subr.mxu0 0.0
    %285 = vmatpush2.msra.mxu0 0.0
    %286 = vmatprep.subr.mxu0 0.0
    %287 = vmatpush2.msra.mxu0 0.0
    %288 = vmatprep.subr.mxu0 0.0
    %289 = vmatpush2.msra.mxu0 0.0
    %290 = vmatprep.subr.mxu0 0.0
    %291 = vmatpush2.msra.mxu0 0.0
    %292 = vmatprep.subr.mxu0 0.0
    %293 = vmatpush2.msra.mxu0 0.0
    %294 = vmatprep.subr.mxu0 0.0
    %295 = vmatpush2.msra.mxu0 0.0
    %296 = vmatprep.mubr.f32.mxu0 0.0
    %297 = vmatmul.mubr.f32.gmra.mxu0 %v51
    %v298 = vpop.f32.mrf.mxu0
    %v299 = vadd.f32 0.0, %v298
    %v300 = vpop.f32.mrf.mxu0
    %301 = vmatprep.mubr.f32.mxu0 0.0
    %302 = vmatmul.mubr.f32.gmra.mxu0 %v54
    %v303 = vpop.f32.mrf.mxu0
    %v304 = vadd.f32 0.0, %v303
    %v305 = vpop.f32.mrf.mxu0
    %306 = vmatprep.mubr.f32.mxu0 0.0
    %307 = vmatmul.mubr.f32.gmra.mxu0 %v57
    %v308 = vpop.f32.mrf.mxu0
    %v309 = vadd.f32 0.0, %v308
    %v310 = vpop.f32.mrf.mxu0
    %311 = vmatprep.mubr.f32.mxu0 0.0
    %312 = vmatmul.mubr.f32.gmra.mxu0 %v60
    %v313 = vpop.f32.mrf.mxu0
    %v314 = vadd.f32 0.0, %v313
    %v315 = vpop.f32.mrf.mxu0
    %316 = vdwg.mxu0
    %317 = vmatprep.subr.mxu0 0.0
    %318 = vmatpush1.msra.mxu0 0.0
    %319 = vmatprep.subr.mxu0 0.0
    %320 = vmatpush1.msra.mxu0 0.0
    %321 = vmatprep.subr.mxu0 0.0
    %322 = vmatpush1.msra.mxu0 0.0
    %323 = vmatprep.subr.mxu0 0.0
    %324 = vmatpush1.msra.mxu0 0.0
    %325 = vmatprep.subr.mxu0 0.0
    %326 = vmatpush1.msra.mxu0 0.0
    %327 = vmatprep.subr.mxu0 0.0
    %328 = vmatpush1.msra.mxu0 0.0
    %329 = vmatprep.subr.mxu0 0.0
    %330 = vmatpush1.msra.mxu0 0.0
    %331 = vmatprep.subr.mxu0 0.0
    %332 = vmatpush1.msra.mxu0 0.0
    %333 = vmatprep.subr.mxu0 0.0
    %334 = vmatpush1.msra.mxu0 0.0
    %335 = vmatprep.subr.mxu0 0.0
    %336 = vmatpush1.msra.mxu0 0.0
    %337 = vmatprep.subr.mxu0 0.0
    %338 = vmatpush1.msra.mxu0 0.0
    %339 = vmatprep.subr.mxu0 0.0
    %340 = vmatpush1.msra.mxu0 0.0
    %341 = vmatprep.subr.mxu0 0.0
    %342 = vmatpush1.msra.mxu0 0.0
    %343 = vmatprep.subr.mxu0 0.0
    %344 = vmatpush1.msra.mxu0 0.0
    %345 = vmatprep.subr.mxu0 0.0
    %346 = vmatpush1.msra.mxu0 %v36
    %347 = vmatprep.subr.mxu0 0.0
    %348 = vmatpush1.msra.mxu0 %v35
    %349 = vmatprep.subr.mxu0 0.0
    %350 = vmatpush2.msra.mxu0 0.0
    %351 = vmatprep.subr.mxu0 0.0
    %352 = vmatpush2.msra.mxu0 0.0
    %353 = vmatprep.subr.mxu0 0.0
    %354 = vmatpush2.msra.mxu0 0.0
    %355 = vmatprep.subr.mxu0 0.0
    %356 = vmatpush2.msra.mxu0 0.0
    %357 = vmatprep.subr.mxu0 0.0
    %358 = vmatpush2.msra.mxu0 0.0
    %359 = vmatprep.subr.mxu0 0.0
    %360 = vmatpush2.msra.mxu0 0.0
    %361 = vmatprep.subr.mxu0 0.0
    %362 = vmatpush2.msra.mxu0 0.0
    %363 = vmatprep.subr.mxu0 0.0
    %364 = vmatpush2.msra.mxu0 0.0
    %365 = vmatprep.subr.mxu0 0.0
    %366 = vmatpush2.msra.mxu0 0.0
    %367 = vmatprep.subr.mxu0 0.0
    %368 = vmatpush2.msra.mxu0 0.0
    %369 = vmatprep.subr.mxu0 0.0
    %370 = vmatpush2.msra.mxu0 0.0
    %371 = vmatprep.subr.mxu0 0.0
    %372 = vmatpush2.msra.mxu0 0.0
    %373 = vmatprep.subr.mxu0 0.0
    %374 = vmatpush2.msra.mxu0 0.0
    %375 = vmatprep.subr.mxu0 0.0
    %376 = vmatpush2.msra.mxu0 0.0
    %377 = vmatprep.subr.mxu0 0.0
    %378 = vmatpush2.msra.mxu0 0.0
    %379 = vmatprep.subr.mxu0 0.0
    %380 = vmatpush2.msra.mxu0 0.0
    %381 = vmatprep.mubr.f32.mxu0 0.0
    %382 = vmatmul.mubr.f32.gmra.mxu0 %v51
    %v383 = vpop.f32.mrf.mxu0
    %v384 = vadd.f32 0.0, %v383
    %v385 = vpop.f32.mrf.mxu0
    %386 = vmatprep.mubr.f32.mxu0 0.0
    %387 = vmatmul.mubr.f32.gmra.mxu0 %v54
    %v388 = vpop.f32.mrf.mxu0
    %v389 = vadd.f32 0.0, %v388
    %v390 = vpop.f32.mrf.mxu0
    %391 = vmatprep.mubr.f32.mxu0 0.0
    %392 = vmatmul.mubr.f32.gmra.mxu0 %v57
    %v393 = vpop.f32.mrf.mxu0
    %v394 = vadd.f32 0.0, %v393
    %v395 = vpop.f32.mrf.mxu0
    %396 = vmatprep.mubr.f32.mxu0 0.0
    %397 = vmatmul.mubr.f32.gmra.mxu0 %v60
    %v398 = vpop.f32.mrf.mxu0
    %v399 = vadd.f32 0.0, %v398
    %v400 = vpop.f32.mrf.mxu0
    %401 = vdwg.mxu0
    %402 = vmatprep.subr.mxu0 0.0
    %403 = vmatpush1.msra.mxu0 0.0
    %404 = vmatprep.subr.mxu0 0.0
    %405 = vmatpush1.msra.mxu0 0.0
    %406 = vmatprep.subr.mxu0 0.0
    %407 = vmatpush1.msra.mxu0 0.0
    %408 = vmatprep.subr.mxu0 0.0
    %409 = vmatpush1.msra.mxu0 0.0
    %410 = vmatprep.subr.mxu0 0.0
    %411 = vmatpush1.msra.mxu0 0.0
    %412 = vmatprep.subr.mxu0 0.0
    %413 = vmatpush1.msra.mxu0 0.0
    %414 = vmatprep.subr.mxu0 0.0
    %415 = vmatpush1.msra.mxu0 0.0
    %416 = vmatprep.subr.mxu0 0.0
    %417 = vmatpush1.msra.mxu0 0.0
    %418 = vmatprep.subr.mxu0 0.0
    %419 = vmatpush1.msra.mxu0 0.0
    %420 = vmatprep.subr.mxu0 0.0
    %421 = vmatpush1.msra.mxu0 0.0
    %422 = vmatprep.subr.mxu0 0.0
    %423 = vmatpush1.msra.mxu0 0.0
    %424 = vmatprep.subr.mxu0 0.0
    %425 = vmatpush1.msra.mxu0 0.0
    %426 = vmatprep.subr.mxu0 0.0
    %427 = vmatpush1.msra.mxu0 0.0
    %428 = vmatprep.subr.mxu0 0.0
    %429 = vmatpush1.msra.mxu0 0.0
    %430 = vmatprep.subr.mxu0 0.0
    %431 = vmatpush1.msra.mxu0 %v38
    %432 = vmatprep.subr.mxu0 0.0
    %433 = vmatpush1.msra.mxu0 %v37
    %434 = vmatprep.subr.mxu0 0.0
    %435 = vmatpush2.msra.mxu0 0.0
    %436 = vmatprep.subr.mxu0 0.0
    %437 = vmatpush2.msra.mxu0 0.0
    %438 = vmatprep.subr.mxu0 0.0
    %439 = vmatpush2.msra.mxu0 0.0
    %440 = vmatprep.subr.mxu0 0.0
    %441 = vmatpush2.msra.mxu0 0.0
    %442 = vmatprep.subr.mxu0 0.0
    %443 = vmatpush2.msra.mxu0 0.0
    %444 = vmatprep.subr.mxu0 0.0
    %445 = vmatpush2.msra.mxu0 0.0
    %446 = vmatprep.subr.mxu0 0.0
    %447 = vmatpush2.msra.mxu0 0.0
    %448 = vmatprep.subr.mxu0 0.0
    %449 = vmatpush2.msra.mxu0 0.0
    %450 = vmatprep.subr.mxu0 0.0
    %451 = vmatpush2.msra.mxu0 0.0
    %452 = vmatprep.subr.mxu0 0.0
    %453 = vmatpush2.msra.mxu0 0.0
    %454 = vmatprep.subr.mxu0 0.0
    %455 = vmatpush2.msra.mxu0 0.0
    %456 = vmatprep.subr.mxu0 0.0
    %457 = vmatpush2.msra.mxu0 0.0
    %458 = vmatprep.subr.mxu0 0.0
    %459 = vmatpush2.msra.mxu0 0.0
    %460 = vmatprep.subr.mxu0 0.0
    %461 = vmatpush2.msra.mxu0 0.0
    %462 = vmatprep.subr.mxu0 0.0
    %463 = vmatpush2.msra.mxu0 0.0
    %464 = vmatprep.subr.mxu0 0.0
    %465 = vmatpush2.msra.mxu0 0.0
    %466 = vmatprep.mubr.f32.mxu0 0.0
    %467 = vmatmul.mubr.f32.gmra.mxu0 %v51
    %v468 = vpop.f32.mrf.mxu0
    %v469 = vadd.f32 0.0, %v468
    %v470 = vpop.f32.mrf.mxu0
    %471 = vmatprep.mubr.f32.mxu0 0.0
    %472 = vmatmul.mubr.f32.gmra.mxu0 %v54
    %v473 = vpop.f32.mrf.mxu0
    %v474 = vadd.f32 0.0, %v473
    %v475 = vpop.f32.mrf.mxu0
    %476 = vmatprep.mubr.f32.mxu0 0.0
    %477 = vmatmul.mubr.f32.gmra.mxu0 %v57
    %v478 = vpop.f32.mrf.mxu0
    %v479 = vadd.f32 0.0, %v478
    %v480 = vpop.f32.mrf.mxu0
    %481 = vmatprep.mubr.f32.mxu0 0.0
    %482 = vmatmul.mubr.f32.gmra.mxu0 %v60
    %v483 = vpop.f32.mrf.mxu0
    %v484 = vadd.f32 0.0, %v483
    %v485 = vpop.f32.mrf.mxu0
    %486 = vdwg.mxu0
    %487 = vmatprep.subr.mxu0 0.0
    %488 = vmatpush1.msra.mxu0 0.0
    %489 = vmatprep.subr.mxu0 0.0
    %490 = vmatpush1.msra.mxu0 0.0
    %491 = vmatprep.subr.mxu0 0.0
    %492 = vmatpush1.msra.mxu0 0.0
    %493 = vmatprep.subr.mxu0 0.0
    %494 = vmatpush1.msra.mxu0 0.0
    %495 = vmatprep.subr.mxu0 0.0
    %496 = vmatpush1.msra.mxu0 0.0
    %497 = vmatprep.subr.mxu0 0.0
    %498 = vmatpush1.msra.mxu0 0.0
    %499 = vmatprep.subr.mxu0 0.0
    %500 = vmatpush1.msra.mxu0 0.0
    %501 = vmatprep.subr.mxu0 0.0
    %502 = vmatpush1.msra.mxu0 0.0
    %503 = vmatprep.subr.mxu0 0.0
    %504 = vmatpush1.msra.mxu0 0.0
    %505 = vmatprep.subr.mxu0 0.0
    %506 = vmatpush1.msra.mxu0 0.0
    %507 = vmatprep.subr.mxu0 0.0
    %508 = vmatpush1.msra.mxu0 0.0
    %509 = vmatprep.subr.mxu0 0.0
    %510 = vmatpush1.msra.mxu0 0.0
    %511 = vmatprep.subr.mxu0 0.0
    %512 = vmatpush1.msra.mxu0 0.0
    %513 = vmatprep.subr.mxu0 0.0
    %514 = vmatpush1.msra.mxu0 0.0
    %515 = vmatprep.subr.mxu0 0.0
    %516 = vmatpush1.msra.mxu0 %v40
    %517 = vmatprep.subr.mxu0 0.0
    %518 = vmatpush1.msra.mxu0 %v39
    %519 = vmatprep.subr.mxu0 0.0
    %520 = vmatpush2.msra.mxu0 0.0
    %521 = vmatprep.subr.mxu0 0.0
    %522 = vmatpush2.msra.mxu0 0.0
    %523 = vmatprep.subr.mxu0 0.0
    %524 = vmatpush2.msra.mxu0 0.0
    %525 = vmatprep.subr.mxu0 0.0
    %526 = vmatpush2.msra.mxu0 0.0
    %527 = vmatprep.subr.mxu0 0.0
    %528 = vmatpush2.msra.mxu0 0.0
    %529 = vmatprep.subr.mxu0 0.0
    %530 = vmatpush2.msra.mxu0 0.0
    %531 = vmatprep.subr.mxu0 0.0
    %532 = vmatpush2.msra.mxu0 0.0
    %533 = vmatprep.subr.mxu0 0.0
    %534 = vmatpush2.msra.mxu0 0.0
    %535 = vmatprep.subr.mxu0 0.0
    %536 = vmatpush2.msra.mxu0 0.0
    %537 = vmatprep.subr.mxu0 0.0
    %538 = vmatpush2.msra.mxu0 0.0
    %539 = vmatprep.subr.mxu0 0.0
    %540 = vmatpush2.msra.mxu0 0.0
    %541 = vmatprep.subr.mxu0 0.0
    %542 = vmatpush2.msra.mxu0 0.0
    %543 = vmatprep.subr.mxu0 0.0
    %544 = vmatpush2.msra.mxu0 0.0
    %545 = vmatprep.subr.mxu0 0.0
    %546 = vmatpush2.msra.mxu0 0.0
    %547 = vmatprep.subr.mxu0 0.0
    %548 = vmatpush2.msra.mxu0 0.0
    %549 = vmatprep.subr.mxu0 0.0
    %550 = vmatpush2.msra.mxu0 0.0
    %551 = vmatprep.mubr.f32.mxu0 0.0
    %552 = vmatmul.mubr.f32.gmra.mxu0 %v51
    %v553 = vpop.f32.mrf.mxu0
    %v554 = vadd.f32 0.0, %v553
    %v555 = vpop.f32.mrf.mxu0
    %556 = vmatprep.mubr.f32.mxu0 0.0
    %557 = vmatmul.mubr.f32.gmra.mxu0 %v54
    %v558 = vpop.f32.mrf.mxu0
    %v559 = vadd.f32 0.0, %v558
    %v560 = vpop.f32.mrf.mxu0
    %561 = vmatprep.mubr.f32.mxu0 0.0
    %562 = vmatmul.mubr.f32.gmra.mxu0 %v57
    %v563 = vpop.f32.mrf.mxu0
    %v564 = vadd.f32 0.0, %v563
    %v565 = vpop.f32.mrf.mxu0
    %566 = vmatprep.mubr.f32.mxu0 0.0
    %567 = vmatmul.mubr.f32.gmra.mxu0 %v60
    %v568 = vpop.f32.mrf.mxu0
    %v569 = vadd.f32 0.0, %v568
    %v570 = vpop.f32.mrf.mxu0
    %571 = vdwg.mxu0
    %572 = vmatprep.subr.mxu0 0.0
    %573 = vmatpush1.msra.mxu0 0.0
    %574 = vmatprep.subr.mxu0 0.0
    %575 = vmatpush1.msra.mxu0 0.0
    %576 = vmatprep.subr.mxu0 0.0
    %577 = vmatpush1.msra.mxu0 0.0
    %578 = vmatprep.subr.mxu0 0.0
    %579 = vmatpush1.msra.mxu0 0.0
    %580 = vmatprep.subr.mxu0 0.0
    %581 = vmatpush1.msra.mxu0 0.0
    %582 = vmatprep.subr.mxu0 0.0
    %583 = vmatpush1.msra.mxu0 0.0
    %584 = vmatprep.subr.mxu0 0.0
    %585 = vmatpush1.msra.mxu0 0.0
    %586 = vmatprep.subr.mxu0 0.0
    %587 = vmatpush1.msra.mxu0 0.0
    %588 = vmatprep.subr.mxu0 0.0
    %589 = vmatpush1.msra.mxu0 0.0
    %590 = vmatprep.subr.mxu0 0.0
    %591 = vmatpush1.msra.mxu0 0.0
    %592 = vmatprep.subr.mxu0 0.0
    %593 = vmatpush1.msra.mxu0 0.0
    %594 = vmatprep.subr.mxu0 0.0
    %595 = vmatpush1.msra.mxu0 0.0
    %596 = vmatprep.subr.mxu0 0.0
    %597 = vmatpush1.msra.mxu0 0.0
    %598 = vmatprep.subr.mxu0 0.0
    %599 = vmatpush1.msra.mxu0 0.0
    %600 = vmatprep.subr.mxu0 0.0
    %601 = vmatpush1.msra.mxu0 %v42
    %602 = vmatprep.subr.mxu0 0.0
    %603 = vmatpush1.msra.mxu0 %v41
    %604 = vmatprep.subr.mxu0 0.0
    %605 = vmatpush2.msra.mxu0 0.0
    %606 = vmatprep.subr.mxu0 0.0
    %607 = vmatpush2.msra.mxu0 0.0
    %608 = vmatprep.subr.mxu0 0.0
    %609 = vmatpush2.msra.mxu0 0.0
    %610 = vmatprep.subr.mxu0 0.0
    %611 = vmatpush2.msra.mxu0 0.0
    %612 = vmatprep.subr.mxu0 0.0
    %613 = vmatpush2.msra.mxu0 0.0
    %614 = vmatprep.subr.mxu0 0.0
    %615 = vmatpush2.msra.mxu0 0.0
    %616 = vmatprep.subr.mxu0 0.0
    %617 = vmatpush2.msra.mxu0 0.0
    %618 = vmatprep.subr.mxu0 0.0
    %619 = vmatpush2.msra.mxu0 0.0
    %620 = vmatprep.subr.mxu0 0.0
    %621 = vmatpush2.msra.mxu0 0.0
    %622 = vmatprep.subr.mxu0 0.0
    %623 = vmatpush2.msra.mxu0 0.0
    %624 = vmatprep.subr.mxu0 0.0
    %625 = vmatpush2.msra.mxu0 0.0
    %626 = vmatprep.subr.mxu0 0.0
    %627 = vmatpush2.msra.mxu0 0.0
    %628 = vmatprep.subr.mxu0 0.0
    %629 = vmatpush2.msra.mxu0 0.0
    %630 = vmatprep.subr.mxu0 0.0
    %631 = vmatpush2.msra.mxu0 0.0
    %632 = vmatprep.subr.mxu0 0.0
    %633 = vmatpush2.msra.mxu0 0.0
    %634 = vmatprep.subr.mxu0 0.0
    %635 = vmatpush2.msra.mxu0 0.0
    %636 = vmatprep.mubr.f32.mxu0 0.0
    %637 = vmatmul.mubr.f32.gmra.mxu0 %v51
    %v638 = vpop.f32.mrf.mxu0
    %v639 = vadd.f32 0.0, %v638
    %v640 = vpop.f32.mrf.mxu0
    %641 = vmatprep.mubr.f32.mxu0 0.0
    %642 = vmatmul.mubr.f32.gmra.mxu0 %v54
    %v643 = vpop.f32.mrf.mxu0
    %v644 = vadd.f32 0.0, %v643
    %v645 = vpop.f32.mrf.mxu0
    %646 = vmatprep.mubr.f32.mxu0 0.0
    %647 = vmatmul.mubr.f32.gmra.mxu0 %v57
    %v648 = vpop.f32.mrf.mxu0
    %v649 = vadd.f32 0.0, %v648
    %v650 = vpop.f32.mrf.mxu0
    %651 = vmatprep.mubr.f32.mxu0 0.0
    %652 = vmatmul.mubr.f32.gmra.mxu0 %v60
    %v653 = vpop.f32.mrf.mxu0
    %v654 = vadd.f32 0.0, %v653
    %v655 = vpop.f32.mrf.mxu0
    %656 = vdwg.mxu0
    %657 = vmatprep.subr.mxu0 0.0
    %658 = vmatpush1.msra.mxu0 0.0
    %659 = vmatprep.subr.mxu0 0.0
    %660 = vmatpush1.msra.mxu0 0.0
    %661 = vmatprep.subr.mxu0 0.0
    %662 = vmatpush1.msra.mxu0 0.0
    %663 = vmatprep.subr.mxu0 0.0
    %664 = vmatpush1.msra.mxu0 0.0
    %665 = vmatprep.subr.mxu0 0.0
    %666 = vmatpush1.msra.mxu0 0.0
    %667 = vmatprep.subr.mxu0 0.0
    %668 = vmatpush1.msra.mxu0 0.0
    %669 = vmatprep.subr.mxu0 0.0
    %670 = vmatpush1.msra.mxu0 0.0
    %671 = vmatprep.subr.mxu0 0.0
    %672 = vmatpush1.msra.mxu0 0.0
    %673 = vmatprep.subr.mxu0 0.0
    %674 = vmatpush1.msra.mxu0 0.0
    %675 = vmatprep.subr.mxu0 0.0
    %676 = vmatpush1.msra.mxu0 0.0
    %677 = vmatprep.subr.mxu0 0.0
    %678 = vmatpush1.msra.mxu0 0.0
    %679 = vmatprep.subr.mxu0 0.0
    %680 = vmatpush1.msra.mxu0 0.0
    %681 = vmatprep.subr.mxu0 0.0
    %682 = vmatpush1.msra.mxu0 0.0
    %683 = vmatprep.subr.mxu0 0.0
    %684 = vmatpush1.msra.mxu0 0.0
    %685 = vmatprep.subr.mxu0 0.0
    %686 = vmatpush1.msra.mxu0 %v44
    %687 = vmatprep.subr.mxu0 0.0
    %688 = vmatpush1.msra.mxu0 %v43
    %689 = vmatprep.subr.mxu0 0.0
    %690 = vmatpush2.msra.mxu0 0.0
    %691 = vmatprep.subr.mxu0 0.0
    %692 = vmatpush2.msra.mxu0 0.0
    %693 = vmatprep.subr.mxu0 0.0
    %694 = vmatpush2.msra.mxu0 0.0
    %695 = vmatprep.subr.mxu0 0.0
    %696 = vmatpush2.msra.mxu0 0.0
    %697 = vmatprep.subr.mxu0 0.0
    %698 = vmatpush2.msra.mxu0 0.0
    %699 = vmatprep.subr.mxu0 0.0
    %700 = vmatpush2.msra.mxu0 0.0
    %701 = vmatprep.subr.mxu0 0.0
    %702 = vmatpush2.msra.mxu0 0.0
    %703 = vmatprep.subr.mxu0 0.0
    %704 = vmatpush2.msra.mxu0 0.0
    %705 = vmatprep.subr.mxu0 0.0
    %706 = vmatpush2.msra.mxu0 0.0
    %707 = vmatprep.subr.mxu0 0.0
    %708 = vmatpush2.msra.mxu0 0.0
    %709 = vmatprep.subr.mxu0 0.0
    %710 = vmatpush2.msra.mxu0 0.0
    %711 = vmatprep.subr.mxu0 0.0
    %712 = vmatpush2.msra.mxu0 0.0
    %713 = vmatprep.subr.mxu0 0.0
    %714 = vmatpush2.msra.mxu0 0.0
    %715 = vmatprep.subr.mxu0 0.0
    %716 = vmatpush2.msra.mxu0 0.0
    %717 = vmatprep.subr.mxu0 0.0
    %718 = vmatpush2.msra.mxu0 0.0
    %719 = vmatprep.subr.mxu0 0.0
    %720 = vmatpush2.msra.mxu0 0.0
    %721 = vmatprep.mubr.f32.mxu0 0.0
    %722 = vmatmul.mubr.f32.gmra.mxu0 %v51
    %v723 = vpop.f32.mrf.mxu0
    %v724 = vadd.f32 0.0, %v723
    %v725 = vpop.f32.mrf.mxu0
    %726 = vmatprep.mubr.f32.mxu0 0.0
    %727 = vmatmul.mubr.f32.gmra.mxu0 %v54
    %v728 = vpop.f32.mrf.mxu0
    %v729 = vadd.f32 0.0, %v728
    %v730 = vpop.f32.mrf.mxu0
    %731 = vmatprep.mubr.f32.mxu0 0.0
    %732 = vmatmul.mubr.f32.gmra.mxu0 %v57
    %v733 = vpop.f32.mrf.mxu0
    %v734 = vadd.f32 0.0, %v733
    %v735 = vpop.f32.mrf.mxu0
    %736 = vmatprep.mubr.f32.mxu0 0.0
    %737 = vmatmul.mubr.f32.gmra.mxu0 %v60
    %v738 = vpop.f32.mrf.mxu0
    %v739 = vadd.f32 0.0, %v738
    %v740 = vpop.f32.mrf.mxu0
    %741 = vdwg.mxu0
    %v742 = vld [vmem:[%s1] sm:$0xff]
    %v743 = vld [vmem:[%s1 + $0x8] sm:$0xff]
    %v745 = vsel %vm49, %v129, 0
    %v748 = vsel %vm49, %v134, 0
    %v751 = vsel %vm49, %v139, 0
    %v754 = vsel %vm49, %v144, 0
    %756 = vmatprep.subr.mxu0 0.0
    %757 = vmatpush1.msra.mxu0 0.0
    %758 = vmatprep.subr.mxu0 0.0
    %759 = vmatpush1.msra.mxu0 0.0
    %760 = vmatprep.subr.mxu0 0.0
    %761 = vmatpush1.msra.mxu0 0.0
    %762 = vmatprep.subr.mxu0 0.0
    %763 = vmatpush1.msra.mxu0 0.0
    %764 = vmatprep.subr.mxu0 0.0
    %765 = vmatpush1.msra.mxu0 0.0
    %766 = vmatprep.subr.mxu0 0.0
    %767 = vmatpush1.msra.mxu0 0.0
    %768 = vmatprep.subr.mxu0 0.0
    %769 = vmatpush1.msra.mxu0 0.0
    %770 = vmatprep.subr.mxu0 0.0
    %771 = vmatpush1.msra.mxu0 0.0
    %772 = vmatprep.subr.mxu0 0.0
    %773 = vmatpush1.msra.mxu0 0.0
    %774 = vmatprep.subr.mxu0 0.0
    %775 = vmatpush1.msra.mxu0 0.0
    %776 = vmatprep.subr.mxu0 0.0
    %777 = vmatpush1.msra.mxu0 0.0
    %778 = vmatprep.subr.mxu0 0.0
    %779 = vmatpush1.msra.mxu0 0.0
    %780 = vmatprep.subr.mxu0 0.0
    %781 = vmatpush1.msra.mxu0 0.0
    %782 = vmatprep.subr.mxu0 0.0
    %783 = vmatpush1.msra.mxu0 0.0
    %784 = vmatprep.subr.mxu0 0.0
    %785 = vmatpush1.msra.mxu0 %v743
    %786 = vmatprep.subr.mxu0 0.0
    %787 = vmatpush1.msra.mxu0 %v742
    %788 = vmatprep.subr.mxu0 0.0
    %789 = vmatpush2.msra.mxu0 0.0
    %790 = vmatprep.subr.mxu0 0.0
    %791 = vmatpush2.msra.mxu0 0.0
    %792 = vmatprep.subr.mxu0 0.0
    %793 = vmatpush2.msra.mxu0 0.0
    %794 = vmatprep.subr.mxu0 0.0
    %795 = vmatpush2.msra.mxu0 0.0
    %796 = vmatprep.subr.mxu0 0.0
    %797 = vmatpush2.msra.mxu0 0.0
    %798 = vmatprep.subr.mxu0 0.0
    %799 = vmatpush2.msra.mxu0 0.0
    %800 = vmatprep.subr.mxu0 0.0
    %801 = vmatpush2.msra.mxu0 0.0
    %802 = vmatprep.subr.mxu0 0.0
    %803 = vmatpush2.msra.mxu0 0.0
    %804 = vmatprep.subr.mxu0 0.0
    %805 = vmatpush2.msra.mxu0 0.0
    %806 = vmatprep.subr.mxu0 0.0
    %807 = vmatpush2.msra.mxu0 0.0
    %808 = vmatprep.subr.mxu0 0.0
    %809 = vmatpush2.msra.mxu0 0.0
    %810 = vmatprep.subr.mxu0 0.0
    %811 = vmatpush2.msra.mxu0 0.0
    %812 = vmatprep.subr.mxu0 0.0
    %813 = vmatpush2.msra.mxu0 0.0
    %814 = vmatprep.subr.mxu0 0.0
    %815 = vmatpush2.msra.mxu0 0.0
    %816 = vmatprep.subr.mxu0 0.0
    %817 = vmatpush2.msra.mxu0 0.0
    %818 = vmatprep.subr.mxu0 0.0
    %819 = vmatpush2.msra.mxu0 0.0
    %820 = vmatprep.mubr.f32.mxu0 0.0
    %821 = vmatmul.mubr.f32.gmra.mxu0 %v745
    %v822 = vpop.f32.mrf.mxu0
    %v823 = vadd.f32 0.0, %v822
    %v824 = vpop.f32.mrf.mxu0
    %825 = vmatprep.mubr.f32.mxu0 0.0
    %826 = vmatmul.mubr.f32.gmra.mxu0 %v748
    %v827 = vpop.f32.mrf.mxu0
    %v828 = vadd.f32 0.0, %v827
    %v829 = vpop.f32.mrf.mxu0
    %830 = vmatprep.mubr.f32.mxu0 0.0
    %831 = vmatmul.mubr.f32.gmra.mxu0 %v751
    %v832 = vpop.f32.mrf.mxu0
    %v833 = vadd.f32 0.0, %v832
    %v834 = vpop.f32.mrf.mxu0
    %835 = vmatprep.mubr.f32.mxu0 0.0
    %836 = vmatmul.mubr.f32.gmra.mxu0 %v754
    %v837 = vpop.f32.mrf.mxu0
    %v838 = vadd.f32 0.0, %v837
    %v839 = vpop.f32.mrf.mxu0
    %840 = vdwg.mxu0
    %v842 = vsel %vm49, %v214, 0
    %v845 = vsel %vm49, %v219, 0
    %v848 = vsel %vm49, %v224, 0
    %v851 = vsel %vm49, %v229, 0
    %853 = vmatprep.subr.mxu0 0.0
    %854 = vmatpush1.msra.mxu0 0.0
    %855 = vmatprep.subr.mxu0 0.0
    %856 = vmatpush1.msra.mxu0 0.0
    %857 = vmatprep.subr.mxu0 0.0
    %858 = vmatpush1.msra.mxu0 0.0
    %859 = vmatprep.subr.mxu0 0.0
    %860 = vmatpush1.msra.mxu0 0.0
    %861 = vmatprep.subr.mxu0 0.0
    %862 = vmatpush1.msra.mxu0 0.0
    %863 = vmatprep.subr.mxu0 0.0
    %864 = vmatpush1.msra.mxu0 0.0
    %865 = vmatprep.subr.mxu0 0.0
    %866 = vmatpush1.msra.mxu0 0.0
    %867 = vmatprep.subr.mxu0 0.0
    %868 = vmatpush1.msra.mxu0 0.0
    %869 = vmatprep.subr.mxu0 0.0
    %870 = vmatpush1.msra.mxu0 0.0
    %871 = vmatprep.subr.mxu0 0.0
    %872 = vmatpush1.msra.mxu0 0.0
    %873 = vmatprep.subr.mxu0 0.0
    %874 = vmatpush1.msra.mxu0 0.0
    %875 = vmatprep.subr.mxu0 0.0
    %876 = vmatpush1.msra.mxu0 0.0
    %877 = vmatprep.subr.mxu0 0.0
    %878 = vmatpush1.msra.mxu0 0.0
    %879 = vmatprep.subr.mxu0 0.0
    %880 = vmatpush1.msra.mxu0 0.0
    %881 = vmatprep.subr.mxu0 0.0
    %882 = vmatpush1.msra.mxu0 %v743
    %883 = vmatprep.subr.mxu0 0.0
    %884 = vmatpush1.msra.mxu0 %v742
    %885 = vmatprep.subr.mxu0 0.0
    %886 = vmatpush2.msra.mxu0 0.0
    %887 = vmatprep.subr.mxu0 0.0
    %888 = vmatpush2.msra.mxu0 0.0
    %889 = vmatprep.subr.mxu0 0.0
    %890 = vmatpush2.msra.mxu0 0.0
    %891 = vmatprep.subr.mxu0 0.0
    %892 = vmatpush2.msra.mxu0 0.0
    %893 = vmatprep.subr.mxu0 0.0
    %894 = vmatpush2.msra.mxu0 0.0
    %895 = vmatprep.subr.mxu0 0.0
    %896 = vmatpush2.msra.mxu0 0.0
    %897 = vmatprep.subr.mxu0 0.0
    %898 = vmatpush2.msra.mxu0 0.0
    %899 = vmatprep.subr.mxu0 0.0
    %900 = vmatpush2.msra.mxu0 0.0
    %901 = vmatprep.subr.mxu0 0.0
    %902 = vmatpush2.msra.mxu0 0.0
    %903 = vmatprep.subr.mxu0 0.0
    %904 = vmatpush2.msra.mxu0 0.0
    %905 = vmatprep.subr.mxu0 0.0
    %906 = vmatpush2.msra.mxu0 0.0
    %907 = vmatprep.subr.mxu0 0.0
    %908 = vmatpush2.msra.mxu0 0.0
    %909 = vmatprep.subr.mxu0 0.0
    %910 = vmatpush2.msra.mxu0 0.0
    %911 = vmatprep.subr.mxu0 0.0
    %912 = vmatpush2.msra.mxu0 0.0
    %913 = vmatprep.subr.mxu0 0.0
    %914 = vmatpush2.msra.mxu0 0.0
    %915 = vmatprep.subr.mxu0 0.0
    %916 = vmatpush2.msra.mxu0 0.0
    %917 = vmatprep.mubr.f32.mxu0 0.0
    %918 = vmatmul.mubr.f32.gmra.mxu0 %v842
    %v919 = vpop.f32.mrf.mxu0
    %v920 = vadd.f32 0.0, %v919
    %v921 = vpop.f32.mrf.mxu0
    %922 = vmatprep.mubr.f32.mxu0 0.0
    %923 = vmatmul.mubr.f32.gmra.mxu0 %v845
    %v924 = vpop.f32.mrf.mxu0
    %v925 = vadd.f32 0.0, %v924
    %v926 = vpop.f32.mrf.mxu0
    %927 = vmatprep.mubr.f32.mxu0 0.0
    %928 = vmatmul.mubr.f32.gmra.mxu0 %v848
    %v929 = vpop.f32.mrf.mxu0
    %v930 = vadd.f32 0.0, %v929
    %v931 = vpop.f32.mrf.mxu0
    %932 = vmatprep.mubr.f32.mxu0 0.0
    %933 = vmatmul.mubr.f32.gmra.mxu0 %v851
    %v934 = vpop.f32.mrf.mxu0
    %v935 = vadd.f32 0.0, %v934
    %v936 = vpop.f32.mrf.mxu0
    %937 = vdwg.mxu0
    %v939 = vsel %vm49, %v299, 0
    %v942 = vsel %vm49, %v304, 0
    %v945 = vsel %vm49, %v309, 0
    %v948 = vsel %vm49, %v314, 0
    %950 = vmatprep.subr.mxu0 0.0
    %951 = vmatpush1.msra.mxu0 0.0
    %952 = vmatprep.subr.mxu0 0.0
    %953 = vmatpush1.msra.mxu0 0.0
    %954 = vmatprep.subr.mxu0 0.0
    %955 = vmatpush1.msra.mxu0 0.0
    %956 = vmatprep.subr.mxu0 0.0
    %957 = vmatpush1.msra.mxu0 0.0
    %958 = vmatprep.subr.mxu0 0.0
    %959 = vmatpush1.msra.mxu0 0.0
    %960 = vmatprep.subr.mxu0 0.0
    %961 = vmatpush1.msra.mxu0 0.0
    %962 = vmatprep.subr.mxu0 0.0
    %963 = vmatpush1.msra.mxu0 0.0
    %964 = vmatprep.subr.mxu0 0.0
    %965 = vmatpush1.msra.mxu0 0.0
    %966 = vmatprep.subr.mxu0 0.0
    %967 = vmatpush1.msra.mxu0 0.0
    %968 = vmatprep.subr.mxu0 0.0
    %969 = vmatpush1.msra.mxu0 0.0
    %970 = vmatprep.subr.mxu0 0.0
    %971 = vmatpush1.msra.mxu0 0.0
    %972 = vmatprep.subr.mxu0 0.0
    %973 = vmatpush1.msra.mxu0 0.0
    %974 = vmatprep.subr.mxu0 0.0
    %975 = vmatpush1.msra.mxu0 0.0
    %976 = vmatprep.subr.mxu0 0.0
    %977 = vmatpush1.msra.mxu0 0.0
    %978 = vmatprep.subr.mxu0 0.0
    %979 = vmatpush1.msra.mxu0 %v743
    %980 = vmatprep.subr.mxu0 0.0
    %981 = vmatpush1.msra.mxu0 %v742
    %982 = vmatprep.subr.mxu0 0.0
    %983 = vmatpush2.msra.mxu0 0.0
    %984 = vmatprep.subr.mxu0 0.0
    %985 = vmatpush2.msra.mxu0 0.0
    %986 = vmatprep.subr.mxu0 0.0
    %987 = vmatpush2.msra.mxu0 0.0
    %988 = vmatprep.subr.mxu0 0.0
    %989 = vmatpush2.msra.mxu0 0.0
    %990 = vmatprep.subr.mxu0 0.0
    %991 = vmatpush2.msra.mxu0 0.0
    %992 = vmatprep.subr.mxu0 0.0
    %993 = vmatpush2.msra.mxu0 0.0
    %994 = vmatprep.subr.mxu0 0.0
    %995 = vmatpush2.msra.mxu0 0.0
    %996 = vmatprep.subr.mxu0 0.0
    %997 = vmatpush2.msra.mxu0 0.0
    %998 = vmatprep.subr.mxu0 0.0
    %999 = vmatpush2.msra.mxu0 0.0
    %1000 = vmatprep.subr.mxu0 0.0
    %1001 = vmatpush2.msra.mxu0 0.0
    %1002 = vmatprep.subr.mxu0 0.0
    %1003 = vmatpush2.msra.mxu0 0.0
    %1004 = vmatprep.subr.mxu0 0.0
    %1005 = vmatpush2.msra.mxu0 0.0
    %1006 = vmatprep.subr.mxu0 0.0
    %1007 = vmatpush2.msra.mxu0 0.0
    %1008 = vmatprep.subr.mxu0 0.0
    %1009 = vmatpush2.msra.mxu0 0.0
    %1010 = vmatprep.subr.mxu0 0.0
    %1011 = vmatpush2.msra.mxu0 0.0
    %1012 = vmatprep.subr.mxu0 0.0
    %1013 = vmatpush2.msra.mxu0 0.0
    %1014 = vmatprep.mubr.f32.mxu0 0.0
    %1015 = vmatmul.mubr.f32.gmra.mxu0 %v939
    %v1016 = vpop.f32.mrf.mxu0
    %v1017 = vadd.f32 0.0, %v1016
    %v1018 = vpop.f32.mrf.mxu0
    %1019 = vmatprep.mubr.f32.mxu0 0.0
    %1020 = vmatmul.mubr.f32.gmra.mxu0 %v942
    %v1021 = vpop.f32.mrf.mxu0
    %v1022 = vadd.f32 0.0, %v1021
    %v1023 = vpop.f32.mrf.mxu0
    %1024 = vmatprep.mubr.f32.mxu0 0.0
    %1025 = vmatmul.mubr.f32.gmra.mxu0 %v945
    %v1026 = vpop.f32.mrf.mxu0
    %v1027 = vadd.f32 0.0, %v1026
    %v1028 = vpop.f32.mrf.mxu0
    %1029 = vmatprep.mubr.f32.mxu0 0.0
    %1030 = vmatmul.mubr.f32.gmra.mxu0 %v948
    %v1031 = vpop.f32.mrf.mxu0
    %v1032 = vadd.f32 0.0, %v1031
    %v1033 = vpop.f32.mrf.mxu0
    %1034 = vdwg.mxu0
    %v1036 = vsel %vm49, %v384, 0
    %v1039 = vsel %vm49, %v389, 0
    %v1042 = vsel %vm49, %v394, 0
    %v1045 = vsel %vm49, %v399, 0
    %1047 = vmatprep.subr.mxu0 0.0
    %1048 = vmatpush1.msra.mxu0 0.0
    %1049 = vmatprep.subr.mxu0 0.0
    %1050 = vmatpush1.msra.mxu0 0.0
    %1051 = vmatprep.subr.mxu0 0.0
    %1052 = vmatpush1.msra.mxu0 0.0
    %1053 = vmatprep.subr.mxu0 0.0
    %1054 = vmatpush1.msra.mxu0 0.0
    %1055 = vmatprep.subr.mxu0 0.0
    %1056 = vmatpush1.msra.mxu0 0.0
    %1057 = vmatprep.subr.mxu0 0.0
    %1058 = vmatpush1.msra.mxu0 0.0
    %1059 = vmatprep.subr.mxu0 0.0
    %1060 = vmatpush1.msra.mxu0 0.0
    %1061 = vmatprep.subr.mxu0 0.0
    %1062 = vmatpush1.msra.mxu0 0.0
    %1063 = vmatprep.subr.mxu0 0.0
    %1064 = vmatpush1.msra.mxu0 0.0
    %1065 = vmatprep.subr.mxu0 0.0
    %1066 = vmatpush1.msra.mxu0 0.0
    %1067 = vmatprep.subr.mxu0 0.0
    %1068 = vmatpush1.msra.mxu0 0.0
    %1069 = vmatprep.subr.mxu0 0.0
    %1070 = vmatpush1.msra.mxu0 0.0
    %1071 = vmatprep.subr.mxu0 0.0
    %1072 = vmatpush1.msra.mxu0 0.0
    %1073 = vmatprep.subr.mxu0 0.0
    %1074 = vmatpush1.msra.mxu0 0.0
    %1075 = vmatprep.subr.mxu0 0.0
    %1076 = vmatpush1.msra.mxu0 %v743
    %1077 = vmatprep.subr.mxu0 0.0
    %1078 = vmatpush1.msra.mxu0 %v742
    %1079 = vmatprep.subr.mxu0 0.0
    %1080 = vmatpush2.msra.mxu0 0.0
    %1081 = vmatprep.subr.mxu0 0.0
    %1082 = vmatpush2.msra.mxu0 0.0
    %1083 = vmatprep.subr.mxu0 0.0
    %1084 = vmatpush2.msra.mxu0 0.0
    %1085 = vmatprep.subr.mxu0 0.0
    %1086 = vmatpush2.msra.mxu0 0.0
    %1087 = vmatprep.subr.mxu0 0.0
    %1088 = vmatpush2.msra.mxu0 0.0
    %1089 = vmatprep.subr.mxu0 0.0
    %1090 = vmatpush2.msra.mxu0 0.0
    %1091 = vmatprep.subr.mxu0 0.0
    %1092 = vmatpush2.msra.mxu0 0.0
    %1093 = vmatprep.subr.mxu0 0.0
    %1094 = vmatpush2.msra.mxu0 0.0
    %1095 = vmatprep.subr.mxu0 0.0
    %1096 = vmatpush2.msra.mxu0 0.0
    %1097 = vmatprep.subr.mxu0 0.0
    %1098 = vmatpush2.msra.mxu0 0.0
    %1099 = vmatprep.subr.mxu0 0.0
    %1100 = vmatpush2.msra.mxu0 0.0
    %1101 = vmatprep.subr.mxu0 0.0
    %1102 = vmatpush2.msra.mxu0 0.0
    %1103 = vmatprep.subr.mxu0 0.0
    %1104 = vmatpush2.msra.mxu0 0.0
    %1105 = vmatprep.subr.mxu0 0.0
    %1106 = vmatpush2.msra.mxu0 0.0
    %1107 = vmatprep.subr.mxu0 0.0
    %1108 = vmatpush2.msra.mxu0 0.0
    %1109 = vmatprep.subr.mxu0 0.0
    %1110 = vmatpush2.msra.mxu0 0.0
    %1111 = vmatprep.mubr.f32.mxu0 0.0
    %1112 = vmatmul.mubr.f32.gmra.mxu0 %v1036
    %v1113 = vpop.f32.mrf.mxu0
    %v1114 = vadd.f32 0.0, %v1113
    %v1115 = vpop.f32.mrf.mxu0
    %1116 = vmatprep.mubr.f32.mxu0 0.0
    %1117 = vmatmul.mubr.f32.gmra.mxu0 %v1039
    %v1118 = vpop.f32.mrf.mxu0
    %v1119 = vadd.f32 0.0, %v1118
    %v1120 = vpop.f32.mrf.mxu0
    %1121 = vmatprep.mubr.f32.mxu0 0.0
    %1122 = vmatmul.mubr.f32.gmra.mxu0 %v1042
    %v1123 = vpop.f32.mrf.mxu0
    %v1124 = vadd.f32 0.0, %v1123
    %v1125 = vpop.f32.mrf.mxu0
    %1126 = vmatprep.mubr.f32.mxu0 0.0
    %1127 = vmatmul.mubr.f32.gmra.mxu0 %v1045
    %v1128 = vpop.f32.mrf.mxu0
    %v1129 = vadd.f32 0.0, %v1128
    %v1130 = vpop.f32.mrf.mxu0
    %1131 = vdwg.mxu0
    %v1133 = vsel %vm49, %v469, 0
    %v1136 = vsel %vm49, %v474, 0
    %v1139 = vsel %vm49, %v479, 0
    %v1142 = vsel %vm49, %v484, 0
    %1144 = vmatprep.subr.mxu0 0.0
    %1145 = vmatpush1.msra.mxu0 0.0
    %1146 = vmatprep.subr.mxu0 0.0
    %1147 = vmatpush1.msra.mxu0 0.0
    %1148 = vmatprep.subr.mxu0 0.0
    %1149 = vmatpush1.msra.mxu0 0.0
    %1150 = vmatprep.subr.mxu0 0.0
    %1151 = vmatpush1.msra.mxu0 0.0
    %1152 = vmatprep.subr.mxu0 0.0
    %1153 = vmatpush1.msra.mxu0 0.0
    %1154 = vmatprep.subr.mxu0 0.0
    %1155 = vmatpush1.msra.mxu0 0.0
    %1156 = vmatprep.subr.mxu0 0.0
    %1157 = vmatpush1.msra.mxu0 0.0
    %1158 = vmatprep.subr.mxu0 0.0
    %1159 = vmatpush1.msra.mxu0 0.0
    %1160 = vmatprep.subr.mxu0 0.0
    %1161 = vmatpush1.msra.mxu0 0.0
    %1162 = vmatprep.subr.mxu0 0.0
    %1163 = vmatpush1.msra.mxu0 0.0
    %1164 = vmatprep.subr.mxu0 0.0
    %1165 = vmatpush1.msra.mxu0 0.0
    %1166 = vmatprep.subr.mxu0 0.0
    %1167 = vmatpush1.msra.mxu0 0.0
    %1168 = vmatprep.subr.mxu0 0.0
    %1169 = vmatpush1.msra.mxu0 0.0
    %1170 = vmatprep.subr.mxu0 0.0
    %1171 = vmatpush1.msra.mxu0 0.0
    %1172 = vmatprep.subr.mxu0 0.0
    %1173 = vmatpush1.msra.mxu0 %v743
    %1174 = vmatprep.subr.mxu0 0.0
    %1175 = vmatpush1.msra.mxu0 %v742
    %1176 = vmatprep.subr.mxu0 0.0
    %1177 = vmatpush2.msra.mxu0 0.0
    %1178 = vmatprep.subr.mxu0 0.0
    %1179 = vmatpush2.msra.mxu0 0.0
    %1180 = vmatprep.subr.mxu0 0.0
    %1181 = vmatpush2.msra.mxu0 0.0
    %1182 = vmatprep.subr.mxu0 0.0
    %1183 = vmatpush2.msra.mxu0 0.0
    %1184 = vmatprep.subr.mxu0 0.0
    %1185 = vmatpush2.msra.mxu0 0.0
    %1186 = vmatprep.subr.mxu0 0.0
    %1187 = vmatpush2.msra.mxu0 0.0
    %1188 = vmatprep.subr.mxu0 0.0
    %1189 = vmatpush2.msra.mxu0 0.0
    %1190 = vmatprep.subr.mxu0 0.0
    %1191 = vmatpush2.msra.mxu0 0.0
    %1192 = vmatprep.subr.mxu0 0.0
    %1193 = vmatpush2.msra.mxu0 0.0
    %1194 = vmatprep.subr.mxu0 0.0
    %1195 = vmatpush2.msra.mxu0 0.0
    %1196 = vmatprep.subr.mxu0 0.0
    %1197 = vmatpush2.msra.mxu0 0.0
    %1198 = vmatprep.subr.mxu0 0.0
    %1199 = vmatpush2.msra.mxu0 0.0
    %1200 = vmatprep.subr.mxu0 0.0
    %1201 = vmatpush2.msra.mxu0 0.0
    %1202 = vmatprep.subr.mxu0 0.0
    %1203 = vmatpush2.msra.mxu0 0.0
    %1204 = vmatprep.subr.mxu0 0.0
    %1205 = vmatpush2.msra.mxu0 0.0
    %1206 = vmatprep.subr.mxu0 0.0
    %1207 = vmatpush2.msra.mxu0 0.0
    %1208 = vmatprep.mubr.f32.mxu0 0.0
    %1209 = vmatmul.mubr.f32.gmra.mxu0 %v1133
    %v1210 = vpop.f32.mrf.mxu0
    %v1211 = vadd.f32 0.0, %v1210
    %v1212 = vpop.f32.mrf.mxu0
    %1213 = vmatprep.mubr.f32.mxu0 0.0
    %1214 = vmatmul.mubr.f32.gmra.mxu0 %v1136
    %v1215 = vpop.f32.mrf.mxu0
    %v1216 = vadd.f32 0.0, %v1215
    %v1217 = vpop.f32.mrf.mxu0
    %1218 = vmatprep.mubr.f32.mxu0 0.0
    %1219 = vmatmul.mubr.f32.gmra.mxu0 %v1139
    %v1220 = vpop.f32.mrf.mxu0
    %v1221 = vadd.f32 0.0, %v1220
    %v1222 = vpop.f32.mrf.mxu0
    %1223 = vmatprep.mubr.f32.mxu0 0.0
    %1224 = vmatmul.mubr.f32.gmra.mxu0 %v1142
    %v1225 = vpop.f32.mrf.mxu0
    %v1226 = vadd.f32 0.0, %v1225
    %v1227 = vpop.f32.mrf.mxu0
    %1228 = vdwg.mxu0
    %v1230 = vsel %vm49, %v554, 0
    %v1233 = vsel %vm49, %v559, 0
    %v1236 = vsel %vm49, %v564, 0
    %v1239 = vsel %vm49, %v569, 0
    %1241 = vmatprep.subr.mxu0 0.0
    %1242 = vmatpush1.msra.mxu0 0.0
    %1243 = vmatprep.subr.mxu0 0.0
    %1244 = vmatpush1.msra.mxu0 0.0
    %1245 = vmatprep.subr.mxu0 0.0
    %1246 = vmatpush1.msra.mxu0 0.0
    %1247 = vmatprep.subr.mxu0 0.0
    %1248 = vmatpush1.msra.mxu0 0.0
    %1249 = vmatprep.subr.mxu0 0.0
    %1250 = vmatpush1.msra.mxu0 0.0
    %1251 = vmatprep.subr.mxu0 0.0
    %1252 = vmatpush1.msra.mxu0 0.0
    %1253 = vmatprep.subr.mxu0 0.0
    %1254 = vmatpush1.msra.mxu0 0.0
    %1255 = vmatprep.subr.mxu0 0.0
    %1256 = vmatpush1.msra.mxu0 0.0
    %1257 = vmatprep.subr.mxu0 0.0
    %1258 = vmatpush1.msra.mxu0 0.0
    %1259 = vmatprep.subr.mxu0 0.0
    %1260 = vmatpush1.msra.mxu0 0.0
    %1261 = vmatprep.subr.mxu0 0.0
    %1262 = vmatpush1.msra.mxu0 0.0
    %1263 = vmatprep.subr.mxu0 0.0
    %1264 = vmatpush1.msra.mxu0 0.0
    %1265 = vmatprep.subr.mxu0 0.0
    %1266 = vmatpush1.msra.mxu0 0.0
    %1267 = vmatprep.subr.mxu0 0.0
    %1268 = vmatpush1.msra.mxu0 0.0
    %1269 = vmatprep.subr.mxu0 0.0
    %1270 = vmatpush1.msra.mxu0 %v743
    %1271 = vmatprep.subr.mxu0 0.0
    %1272 = vmatpush1.msra.mxu0 %v742
    %1273 = vmatprep.subr.mxu0 0.0
    %1274 = vmatpush2.msra.mxu0 0.0
    %1275 = vmatprep.subr.mxu0 0.0
    %1276 = vmatpush2.msra.mxu0 0.0
    %1277 = vmatprep.subr.mxu0 0.0
    %1278 = vmatpush2.msra.mxu0 0.0
    %1279 = vmatprep.subr.mxu0 0.0
    %1280 = vmatpush2.msra.mxu0 0.0
    %1281 = vmatprep.subr.mxu0 0.0
    %1282 = vmatpush2.msra.mxu0 0.0
    %1283 = vmatprep.subr.mxu0 0.0
    %1284 = vmatpush2.msra.mxu0 0.0
    %1285 = vmatprep.subr.mxu0 0.0
    %1286 = vmatpush2.msra.mxu0 0.0
    %1287 = vmatprep.subr.mxu0 0.0
    %1288 = vmatpush2.msra.mxu0 0.0
    %1289 = vmatprep.subr.mxu0 0.0
    %1290 = vmatpush2.msra.mxu0 0.0
    %1291 = vmatprep.subr.mxu0 0.0
    %1292 = vmatpush2.msra.mxu0 0.0
    %1293 = vmatprep.subr.mxu0 0.0
    %1294 = vmatpush2.msra.mxu0 0.0
    %1295 = vmatprep.subr.mxu0 0.0
    %1296 = vmatpush2.msra.mxu0 0.0
    %1297 = vmatprep.subr.mxu0 0.0
    %1298 = vmatpush2.msra.mxu0 0.0
    %1299 = vmatprep.subr.mxu0 0.0
    %1300 = vmatpush2.msra.mxu0 0.0
    %1301 = vmatprep.subr.mxu0 0.0
    %1302 = vmatpush2.msra.mxu0 0.0
    %1303 = vmatprep.subr.mxu0 0.0
    %1304 = vmatpush2.msra.mxu0 0.0
    %1305 = vmatprep.mubr.f32.mxu0 0.0
    %1306 = vmatmul.mubr.f32.gmra.mxu0 %v1230
    %v1307 = vpop.f32.mrf.mxu0
    %v1308 = vadd.f32 0.0, %v1307
    %v1309 = vpop.f32.mrf.mxu0
    %1310 = vmatprep.mubr.f32.mxu0 0.0
    %1311 = vmatmul.mubr.f32.gmra.mxu0 %v1233
    %v1312 = vpop.f32.mrf.mxu0
    %v1313 = vadd.f32 0.0, %v1312
    %v1314 = vpop.f32.mrf.mxu0
    %1315 = vmatprep.mubr.f32.mxu0 0.0
    %1316 = vmatmul.mubr.f32.gmra.mxu0 %v1236
    %v1317 = vpop.f32.mrf.mxu0
    %v1318 = vadd.f32 0.0, %v1317
    %v1319 = vpop.f32.mrf.mxu0
    %1320 = vmatprep.mubr.f32.mxu0 0.0
    %1321 = vmatmul.mubr.f32.gmra.mxu0 %v1239
    %v1322 = vpop.f32.mrf.mxu0
    %v1323 = vadd.f32 0.0, %v1322
    %v1324 = vpop.f32.mrf.mxu0
    %1325 = vdwg.mxu0
    %v1327 = vsel %vm49, %v639, 0
    %v1330 = vsel %vm49, %v644, 0
    %v1333 = vsel %vm49, %v649, 0
    %v1336 = vsel %vm49, %v654, 0
    %1338 = vmatprep.subr.mxu0 0.0
    %1339 = vmatpush1.msra.mxu0 0.0
    %1340 = vmatprep.subr.mxu0 0.0
    %1341 = vmatpush1.msra.mxu0 0.0
    %1342 = vmatprep.subr.mxu0 0.0
    %1343 = vmatpush1.msra.mxu0 0.0
    %1344 = vmatprep.subr.mxu0 0.0
    %1345 = vmatpush1.msra.mxu0 0.0
    %1346 = vmatprep.subr.mxu0 0.0
    %1347 = vmatpush1.msra.mxu0 0.0
    %1348 = vmatprep.subr.mxu0 0.0
    %1349 = vmatpush1.msra.mxu0 0.0
    %1350 = vmatprep.subr.mxu0 0.0
    %1351 = vmatpush1.msra.mxu0 0.0
    %1352 = vmatprep.subr.mxu0 0.0
    %1353 = vmatpush1.msra.mxu0 0.0
    %1354 = vmatprep.subr.mxu0 0.0
    %1355 = vmatpush1.msra.mxu0 0.0
    %1356 = vmatprep.subr.mxu0 0.0
    %1357 = vmatpush1.msra.mxu0 0.0
    %1358 = vmatprep.subr.mxu0 0.0
    %1359 = vmatpush1.msra.mxu0 0.0
    %1360 = vmatprep.subr.mxu0 0.0
    %1361 = vmatpush1.msra.mxu0 0.0
    %1362 = vmatprep.subr.mxu0 0.0
    %1363 = vmatpush1.msra.mxu0 0.0
    %1364 = vmatprep.subr.mxu0 0.0
    %1365 = vmatpush1.msra.mxu0 0.0
    %1366 = vmatprep.subr.mxu0 0.0
    %1367 = vmatpush1.msra.mxu0 %v743
    %1368 = vmatprep.subr.mxu0 0.0
    %1369 = vmatpush1.msra.mxu0 %v742
    %1370 = vmatprep.subr.mxu0 0.0
    %1371 = vmatpush2.msra.mxu0 0.0
    %1372 = vmatprep.subr.mxu0 0.0
    %1373 = vmatpush2.msra.mxu0 0.0
    %1374 = vmatprep.subr.mxu0 0.0
    %1375 = vmatpush2.msra.mxu0 0.0
    %1376 = vmatprep.subr.mxu0 0.0
    %1377 = vmatpush2.msra.mxu0 0.0
    %1378 = vmatprep.subr.mxu0 0.0
    %1379 = vmatpush2.msra.mxu0 0.0
    %1380 = vmatprep.subr.mxu0 0.0
    %1381 = vmatpush2.msra.mxu0 0.0
    %1382 = vmatprep.subr.mxu0 0.0
    %1383 = vmatpush2.msra.mxu0 0.0
    %1384 = vmatprep.subr.mxu0 0.0
    %1385 = vmatpush2.msra.mxu0 0.0
    %1386 = vmatprep.subr.mxu0 0.0
    %1387 = vmatpush2.msra.mxu0 0.0
    %1388 = vmatprep.subr.mxu0 0.0
    %1389 = vmatpush2.msra.mxu0 0.0
    %1390 = vmatprep.subr.mxu0 0.0
    %1391 = vmatpush2.msra.mxu0 0.0
    %1392 = vmatprep.subr.mxu0 0.0
    %1393 = vmatpush2.msra.mxu0 0.0
    %1394 = vmatprep.subr.mxu0 0.0
    %1395 = vmatpush2.msra.mxu0 0.0
    %1396 = vmatprep.subr.mxu0 0.0
    %1397 = vmatpush2.msra.mxu0 0.0
    %1398 = vmatprep.subr.mxu0 0.0
    %1399 = vmatpush2.msra.mxu0 0.0
    %1400 = vmatprep.subr.mxu0 0.0
    %1401 = vmatpush2.msra.mxu0 0.0
    %1402 = vmatprep.mubr.f32.mxu0 0.0
    %1403 = vmatmul.mubr.f32.gmra.mxu0 %v1327
    %v1404 = vpop.f32.mrf.mxu0
    %v1405 = vadd.f32 0.0, %v1404
    %v1406 = vpop.f32.mrf.mxu0
    %1407 = vmatprep.mubr.f32.mxu0 0.0
    %1408 = vmatmul.mubr.f32.gmra.mxu0 %v1330
    %v1409 = vpop.f32.mrf.mxu0
    %v1410 = vadd.f32 0.0, %v1409
    %v1411 = vpop.f32.mrf.mxu0
    %1412 = vmatprep.mubr.f32.mxu0 0.0
    %1413 = vmatmul.mubr.f32.gmra.mxu0 %v1333
    %v1414 = vpop.f32.mrf.mxu0
    %v1415 = vadd.f32 0.0, %v1414
    %v1416 = vpop.f32.mrf.mxu0
    %1417 = vmatprep.mubr.f32.mxu0 0.0
    %1418 = vmatmul.mubr.f32.gmra.mxu0 %v1336
    %v1419 = vpop.f32.mrf.mxu0
    %v1420 = vadd.f32 0.0, %v1419
    %v1421 = vpop.f32.mrf.mxu0
    %1422 = vdwg.mxu0
    %v1424 = vsel %vm49, %v724, 0
    %v1427 = vsel %vm49, %v729, 0
    %v1430 = vsel %vm49, %v734, 0
    %v1433 = vsel %vm49, %v739, 0
    %1435 = vmatprep.subr.mxu0 0.0
    %1436 = vmatpush1.msra.mxu0 0.0
    %1437 = vmatprep.subr.mxu0 0.0
    %1438 = vmatpush1.msra.mxu0 0.0
    %1439 = vmatprep.subr.mxu0 0.0
    %1440 = vmatpush1.msra.mxu0 0.0
    %1441 = vmatprep.subr.mxu0 0.0
    %1442 = vmatpush1.msra.mxu0 0.0
    %1443 = vmatprep.subr.mxu0 0.0
    %1444 = vmatpush1.msra.mxu0 0.0
    %1445 = vmatprep.subr.mxu0 0.0
    %1446 = vmatpush1.msra.mxu0 0.0
    %1447 = vmatprep.subr.mxu0 0.0
    %1448 = vmatpush1.msra.mxu0 0.0
    %1449 = vmatprep.subr.mxu0 0.0
    %1450 = vmatpush1.msra.mxu0 0.0
    %1451 = vmatprep.subr.mxu0 0.0
    %1452 = vmatpush1.msra.mxu0 0.0
    %1453 = vmatprep.subr.mxu0 0.0
    %1454 = vmatpush1.msra.mxu0 0.0
    %1455 = vmatprep.subr.mxu0 0.0
    %1456 = vmatpush1.msra.mxu0 0.0
    %1457 = vmatprep.subr.mxu0 0.0
    %1458 = vmatpush1.msra.mxu0 0.0
    %1459 = vmatprep.subr.mxu0 0.0
    %1460 = vmatpush1.msra.mxu0 0.0
    %1461 = vmatprep.subr.mxu0 0.0
    %1462 = vmatpush1.msra.mxu0 0.0
    %1463 = vmatprep.subr.mxu0 0.0
    %1464 = vmatpush1.msra.mxu0 %v743
    %1465 = vmatprep.subr.mxu0 0.0
    %1466 = vmatpush1.msra.mxu0 %v742
    %1467 = vmatprep.subr.mxu0 0.0
    %1468 = vmatpush2.msra.mxu0 0.0
    %1469 = vmatprep.subr.mxu0 0.0
    %1470 = vmatpush2.msra.mxu0 0.0
    %1471 = vmatprep.subr.mxu0 0.0
    %1472 = vmatpush2.msra.mxu0 0.0
    %1473 = vmatprep.subr.mxu0 0.0
    %1474 = vmatpush2.msra.mxu0 0.0
    %1475 = vmatprep.subr.mxu0 0.0
    %1476 = vmatpush2.msra.mxu0 0.0
    %1477 = vmatprep.subr.mxu0 0.0
    %1478 = vmatpush2.msra.mxu0 0.0
    %1479 = vmatprep.subr.mxu0 0.0
    %1480 = vmatpush2.msra.mxu0 0.0
    %1481 = vmatprep.subr.mxu0 0.0
    %1482 = vmatpush2.msra.mxu0 0.0
    %1483 = vmatprep.subr.mxu0 0.0
    %1484 = vmatpush2.msra.mxu0 0.0
    %1485 = vmatprep.subr.mxu0 0.0
    %1486 = vmatpush2.msra.mxu0 0.0
    %1487 = vmatprep.subr.mxu0 0.0
    %1488 = vmatpush2.msra.mxu0 0.0
    %1489 = vmatprep.subr.mxu0 0.0
    %1490 = vmatpush2.msra.mxu0 0.0
    %1491 = vmatprep.subr.mxu0 0.0
    %1492 = vmatpush2.msra.mxu0 0.0
    %1493 = vmatprep.subr.mxu0 0.0
    %1494 = vmatpush2.msra.mxu0 0.0
    %1495 = vmatprep.subr.mxu0 0.0
    %1496 = vmatpush2.msra.mxu0 0.0
    %1497 = vmatprep.subr.mxu0 0.0
    %1498 = vmatpush2.msra.mxu0 0.0
    %1499 = vmatprep.mubr.f32.mxu0 0.0
    %1500 = vmatmul.mubr.f32.gmra.mxu0 %v1424
    %v1501 = vpop.f32.mrf.mxu0
    %v1502 = vadd.f32 0.0, %v1501
    %v1503 = vpop.f32.mrf.mxu0
    %1504 = vmatprep.mubr.f32.mxu0 0.0
    %1505 = vmatmul.mubr.f32.gmra.mxu0 %v1427
    %v1506 = vpop.f32.mrf.mxu0
    %v1507 = vadd.f32 0.0, %v1506
    %v1508 = vpop.f32.mrf.mxu0
    %1509 = vmatprep.mubr.f32.mxu0 0.0
    %1510 = vmatmul.mubr.f32.gmra.mxu0 %v1430
    %v1511 = vpop.f32.mrf.mxu0
    %v1512 = vadd.f32 0.0, %v1511
    %v1513 = vpop.f32.mrf.mxu0
    %1514 = vmatprep.mubr.f32.mxu0 0.0
    %1515 = vmatmul.mubr.f32.gmra.mxu0 %v1433
    %v1516 = vpop.f32.mrf.mxu0
    %v1517 = vadd.f32 0.0, %v1516
    %v1518 = vpop.f32.mrf.mxu0
    %1519 = vdwg.mxu0
    %vm1520 = vcmask 261120
    %1521 = vst.msk [vmem:[#allocation5] sm:$0xff] %vm1520, %v823
    %1522 = vst.msk [vmem:[#allocation5 + $0x8] sm:$0xff] %vm1520, %v828
    %1523 = vst.msk [vmem:[#allocation5 + $0x10] sm:$0xff] %vm1520, %v833
    %1524 = vst.msk [vmem:[#allocation5 + $0x18] sm:$0xff] %vm1520, %v838
    %1525 = vst.msk [vmem:[#allocation5 + $0x20] sm:$0xff] %vm1520, %v920
    %1526 = vst.msk [vmem:[#allocation5 + $0x28] sm:$0xff] %vm1520, %v925
    %1527 = vst.msk [vmem:[#allocation5 + $0x30] sm:$0xff] %vm1520, %v930
    %1528 = vst.msk [vmem:[#allocation5 + $0x38] sm:$0xff] %vm1520, %v935
    %1529 = vst.msk [vmem:[#allocation5 + $0x40] sm:$0xff] %vm1520, %v1017
    %1530 = vst.msk [vmem:[#allocation5 + $0x48] sm:$0xff] %vm1520, %v1022
    %1531 = vst.msk [vmem:[#allocation5 + $0x50] sm:$0xff] %vm1520, %v1027
    %1532 = vst.msk [vmem:[#allocation5 + $0x58] sm:$0xff] %vm1520, %v1032
    %1533 = vst.msk [vmem:[#allocation5 + $0x60] sm:$0xff] %vm1520, %v1114
    %1534 = vst.msk [vmem:[#allocation5 + $0x68] sm:$0xff] %vm1520, %v1119
    %1535 = vst.msk [vmem:[#allocation5 + $0x70] sm:$0xff] %vm1520, %v1124
    %1536 = vst.msk [vmem:[#allocation5 + $0x78] sm:$0xff] %vm1520, %v1129
    %1537 = vst.msk [vmem:[#allocation5 + $0x80] sm:$0xff] %vm1520, %v1211
    %1538 = vst.msk [vmem:[#allocation5 + $0x88] sm:$0xff] %vm1520, %v1216
    %1539 = vst.msk [vmem:[#allocation5 + $0x90] sm:$0xff] %vm1520, %v1221
    %1540 = vst.msk [vmem:[#allocation5 + $0x98] sm:$0xff] %vm1520, %v1226
    %1541 = vst.msk [vmem:[#allocation5 + $0xa0] sm:$0xff] %vm1520, %v1308
    %1542 = vst.msk [vmem:[#allocation5 + $0xa8] sm:$0xff] %vm1520, %v1313
    %1543 = vst.msk [vmem:[#allocation5 + $0xb0] sm:$0xff] %vm1520, %v1318
    %1544 = vst.msk [vmem:[#allocation5 + $0xb8] sm:$0xff] %vm1520, %v1323
    %1545 = vst.msk [vmem:[#allocation5 + $0xc0] sm:$0xff] %vm1520, %v1405
    %1546 = vst.msk [vmem:[#allocation5 + $0xc8] sm:$0xff] %vm1520, %v1410
    %1547 = vst.msk [vmem:[#allocation5 + $0xd0] sm:$0xff] %vm1520, %v1415
    %1548 = vst.msk [vmem:[#allocation5 + $0xd8] sm:$0xff] %vm1520, %v1420
    %1549 = vst.msk [vmem:[#allocation5 + $0xe0] sm:$0xff] %vm1520, %v1502
    %1550 = vst.msk [vmem:[#allocation5 + $0xe8] sm:$0xff] %vm1520, %v1507
    %1551 = vst.msk [vmem:[#allocation5 + $0xf0] sm:$0xff] %vm1520, %v1512
    %1552 = vst.msk [vmem:[#allocation5 + $0xf8] sm:$0xff] %vm1520, %v1517
    // Predicated region
    $region18: #{tpu_custom_call.1} parent=1 // pred_check
      _
    $region19: #{tpu_custom_call.1} parent=1 // pred_check_branch
      %1554 = sbr.rel (0) target = $region21
    $region20: #{tpu_custom_call.1} parent=1 // pred_region
      %s1556 = ssub.s32 4096, 4096
      %1557 = vsyncadd [#allocation4], %s1556
      %s1558 = sshll.u32 [#allocation5], 4
      %s1559 = int_to_ptr.vmem [resolvable:$true] %s1558
      %1564 = dma.vmem_to_hbm [thread:$0]  %s1559, 4096, %s3, [#allocation4], 128, 128, 8
    $region21: #{tpu_custom_call.1} parent=1 // pred_fallthru
      _
    // Predicated region
    $region22: #{tpu_custom_call.1} parent=1 // pred_check
      _
    $region23: #{tpu_custom_call.1} parent=1 // pred_check_branch
      %1566 = sbr.rel (0) target = $region25
    $region24: #{tpu_custom_call.1} parent=1 // pred_region
      %1567 = dma.done [#allocation4], 4096
    $region25: #{tpu_custom_call.1} parent=1 // pred_fallthru
      _
    %1568 = vsyncpa [#allocation3], 1
    %1569 = vsyncpa [#allocation4], 1

</llo_original>
